<compile_context>
chip_gen: v6e
topology: v6e:2x2x1
jax: 0.10.0
libtpu: 0.0.40
codegen_flags: <defaults>
</compile_context>

<pallas_src>
import functools
import math

import jax
import jax.numpy as jnp
from jax.experimental import pallas as pl
from jax.experimental.pallas import tpu as pltpu


def mha_kernel(x_ref, wq_ref, wk_ref, wv_ref, bq_ref, bk_ref, bv_ref,
               wo_ref, bo_ref, out_ref, attw_ref, *, num_heads, head_dim):
    # Shapes inside the kernel (leading batch dim squeezed by BlockSpec):
    #   x_ref   : (N, E)        wq/wk/wv_ref : (E, E)  (pre-transposed: in_dim x out_dim)
    #   b*_ref  : (1, E)        wo_ref       : (E, E)  bo_ref : (1, E)
    #   out_ref : (N, E)        attw_ref     : (N, N)
    n, e = out_ref.shape
    scale = 1.0 / math.sqrt(head_dim)

    x = x_ref[...].astype(jnp.float32)

    # QKV projections on the MXU with f32 accumulation.
    q = jnp.dot(x, wq_ref[...], preferred_element_type=jnp.float32) + bq_ref[...]
    k = jnp.dot(x, wk_ref[...], preferred_element_type=jnp.float32) + bk_ref[...]
    v = jnp.dot(x, wv_ref[...], preferred_element_type=jnp.float32) + bv_ref[...]

    acc = jnp.zeros((n, e), jnp.float32)     # output-projection accumulator
    w_sum = jnp.zeros((n, n), jnp.float32)   # sum of per-head attention probs

    # Static (unrolled) loop over heads; all per-head work stays 2-D so no
    # in-kernel reshape/transpose of the (N, E) activations is needed.
    for h in range(num_heads):
        lo = h * head_dim
        hi = lo + head_dim
        qh = q[:, lo:hi]
        kh = k[:, lo:hi]
        vh = v[:, lo:hi]

        s = jnp.dot(qh, kh.T, preferred_element_type=jnp.float32) * scale   # (N, N)
        s = s - jnp.max(s, axis=-1, keepdims=True)
        p = jnp.exp(s)
        p = p / jnp.sum(p, axis=-1, keepdims=True)
        w_sum = w_sum + p

        oh = jnp.dot(p, vh, preferred_element_type=jnp.float32)             # (N, Dh)
        # concat_h(o_h) @ Wo^T  ==  sum_h o_h @ Wo^T[head-h row block]  -> no concat needed
        acc = acc + jnp.dot(oh, wo_ref[lo:hi, :], preferred_element_type=jnp.float32)

    out_ref[...] = (acc + bo_ref[...]).astype(out_ref.dtype)
    attw_ref[...] = (w_sum * (1.0 / num_heads)).astype(attw_ref.dtype)


def attention_forward(x, in_proj_w, in_proj_b, out_w, out_b, *, num_heads):
    """x: (B, N, E); in_proj_w: (3E, E); in_proj_b: (3E,); out_w: (E, E); out_b: (E,)."""
    B, N, E = x.shape
    H = num_heads
    assert E % H == 0, "embed_dim must be divisible by num_heads"
    Dh = E // H

    # PyTorch packs q/k/v weights in in_proj_weight; pre-transpose so the kernel does y @ W.
    wq_t = in_proj_w[:E].T
    wk_t = in_proj_w[E:2 * E].T
    wv_t = in_proj_w[2 * E:].T
    bq = in_proj_b[:E].reshape(1, E)
    bk = in_proj_b[E:2 * E].reshape(1, E)
    bv = in_proj_b[2 * E:].reshape(1, E)
    wo_t = out_w.T
    bo = out_b.reshape(1, E)

    kernel = functools.partial(mha_kernel, num_heads=H, head_dim=Dh)

    out, attw = pl.pallas_call(
        kernel,
        out_shape=(jax.ShapeDtypeStruct((B, N, E), x.dtype),
                   jax.ShapeDtypeStruct((B, N, N), jnp.float32)),
        grid_spec=pltpu.PrefetchScalarGridSpec(
            num_scalar_prefetch=0,
            grid=(B,),
            in_specs=[
                pl.BlockSpec((None, N, E), lambda b: (b, 0, 0)),  # x   (whole sequence per step)
                pl.BlockSpec((E, E), lambda b: (0, 0)),           # Wq^T (constant index -> stays resident)
                pl.BlockSpec((E, E), lambda b: (0, 0)),           # Wk^T
                pl.BlockSpec((E, E), lambda b: (0, 0)),           # Wv^T
                pl.BlockSpec((1, E), lambda b: (0, 0)),           # bq
                pl.BlockSpec((1, E), lambda b: (0, 0)),           # bk
                pl.BlockSpec((1, E), lambda b: (0, 0)),           # bv
                pl.BlockSpec((E, E), lambda b: (0, 0)),           # Wo^T
                pl.BlockSpec((1, E), lambda b: (0, 0)),           # bo
            ],
            out_specs=[
                pl.BlockSpec((None, N, E), lambda b: (b, 0, 0)),  # attention_value
                pl.BlockSpec((None, N, N), lambda b: (b, 0, 0)),  # attention_weight (head-averaged)
            ],
        ),
        compiler_params=pltpu.CompilerParams(
            dimension_semantics=("parallel",),   # batch axis shards across TCs on v7x
            vmem_limit_bytes=64 << 20,           # explicit budget (weights + full-seq tiles)
        ),
    )(x, wq_t, wk_t, wv_t, bq, bk, bv, wo_t, bo)

    return out, attw


def attention_ref(x, in_proj_w, in_proj_b, out_w, out_b, num_heads):
    """Plain-JAX reference matching torch.nn.MultiheadAttention semantics (no mask, no dropout)."""
    B, N, E = x.shape
    H = num_heads
    Dh = E // H
    qkv = x @ in_proj_w.T + in_proj_b
    q, k, v = jnp.split(qkv, 3, axis=-1)

    def heads(t):
        return t.reshape(B, N, H, Dh).transpose(0, 2, 1, 3)  # (B, H, N, Dh)

    qh, kh, vh = heads(q), heads(k), heads(v)
    s = jnp.einsum("bhqd,bhkd->bhqk", qh, kh) / math.sqrt(Dh)
    p = jax.nn.softmax(s, axis=-1)
    o = jnp.einsum("bhqk,bhkd->bhqd", p, vh)
    o = o.transpose(0, 2, 1, 3).reshape(B, N, E)
    out = o @ out_w.T + out_b
    return out, p.mean(axis=1)


if __name__ == "__main__":
    B, N, E, H = 2, 8, 32, 4  # batch=2, seq=8, embed_dim=32, num_heads=4

    key = jax.random.PRNGKey(0)
    k1, k2, k3, k4, k5 = jax.random.split(key, 5)

    x = jax.random.normal(k1, (B, N, E), dtype=jnp.float32)
    in_proj_w = jax.random.normal(k2, (3 * E, E), dtype=jnp.float32) * (1.0 / math.sqrt(E))
    in_proj_b = jax.random.normal(k3, (3 * E,), dtype=jnp.float32) * 0.01
    out_w = jax.random.normal(k4, (E, E), dtype=jnp.float32) * (1.0 / math.sqrt(E))
    out_b = jax.random.normal(k5, (E,), dtype=jnp.float32) * 0.01

    value, weight = attention_forward(x, in_proj_w, in_proj_b, out_w, out_b, num_heads=H)
    value = jax.block_until_ready(value)
    weight = jax.block_until_ready(weight)

    ref_value, ref_weight = attention_ref(x, in_proj_w, in_proj_b, out_w, out_b, H)

    assert value.shape == (B, N, E)
    assert weight.shape == (B, N, N)
    assert jnp.allclose(value, ref_value, atol=2e-3, rtol=2e-3), "attention_value mismatch"
    assert jnp.allclose(weight, ref_weight, atol=2e-3, rtol=2e-3), "attention_weight mismatch"

    print("KERNEL_OK")
</pallas_src>

<mosaic_0001>
module attributes {stable_mosaic.version = 11 : i64} {
  func.func @mha_kernel(%arg0: i32, %arg1: memref<1x8x32xf32, #tpu.memory_space<vmem>>, %arg2: memref<32x32xf32, #tpu.memory_space<vmem>>, %arg3: memref<32x32xf32, #tpu.memory_space<vmem>>, %arg4: memref<32x32xf32, #tpu.memory_space<vmem>>, %arg5: memref<1x32xf32, #tpu.memory_space<vmem>>, %arg6: memref<1x32xf32, #tpu.memory_space<vmem>>, %arg7: memref<1x32xf32, #tpu.memory_space<vmem>>, %arg8: memref<32x32xf32, #tpu.memory_space<vmem>>, %arg9: memref<1x32xf32, #tpu.memory_space<vmem>>, %arg10: memref<1x8x32xf32, #tpu.memory_space<vmem>>, %arg11: memref<1x8x8xf32, #tpu.memory_space<vmem>>) attributes {dimension_semantics = [#tpu.dimension_semantics<parallel>], iteration_bounds = array<i64: 2>, scalar_prefetch = 0 : i64, scratch_operands = 0 : i64, tpu.core_type = #tpu.core_type<tc>, window_params = [{transform_indices = @transform_0, window_bounds = array<i64: 1, 8, 32>}, {pipeline_mode = #tpu.pipeline_mode<synchronous>, transform_indices = @transform_1, window_bounds = array<i64: 32, 32>}, {pipeline_mode = #tpu.pipeline_mode<synchronous>, transform_indices = @transform_2, window_bounds = array<i64: 32, 32>}, {pipeline_mode = #tpu.pipeline_mode<synchronous>, transform_indices = @transform_3, window_bounds = array<i64: 32, 32>}, {pipeline_mode = #tpu.pipeline_mode<synchronous>, transform_indices = @transform_4, window_bounds = array<i64: 1, 32>}, {pipeline_mode = #tpu.pipeline_mode<synchronous>, transform_indices = @transform_5, window_bounds = array<i64: 1, 32>}, {pipeline_mode = #tpu.pipeline_mode<synchronous>, transform_indices = @transform_6, window_bounds = array<i64: 1, 32>}, {pipeline_mode = #tpu.pipeline_mode<synchronous>, transform_indices = @transform_7, window_bounds = array<i64: 32, 32>}, {pipeline_mode = #tpu.pipeline_mode<synchronous>, transform_indices = @transform_8, window_bounds = array<i64: 1, 32>}, {transform_indices = @transform_9, window_bounds = array<i64: 1, 8, 32>}, {transform_indices = @transform_10, window_bounds = array<i64: 1, 8, 8>}]} {
    %c0 = arith.constant 0 : index
    %c0_0 = arith.constant 0 : index
    %c0_1 = arith.constant 0 : index
    %0 = vector.load %arg1[%c0, %c0_0, %c0_1] : memref<1x8x32xf32, #tpu.memory_space<vmem>>, vector<1x8x32xf32>
    %1 = vector.shape_cast %0 : vector<1x8x32xf32> to vector<8x32xf32>
    %c0_2 = arith.constant 0 : index
    %c0_3 = arith.constant 0 : index
    %2 = vector.load %arg2[%c0_2, %c0_3] : memref<32x32xf32, #tpu.memory_space<vmem>>, vector<32x32xf32>
    %cst = arith.constant dense<0.000000e+00> : vector<8x32xf32>
    %3 = tpu.matmul %1, %2, %cst {dimension_numbers = #tpu.dot_dimension_numbers<[1], [0], [0], [1], [0, 0, 1, 1], [], []>} : vector<8x32xf32>, vector<32x32xf32>, vector<8x32xf32> -> vector<8x32xf32>
    %c0_4 = arith.constant 0 : index
    %c0_5 = arith.constant 0 : index
    %4 = vector.load %arg5[%c0_4, %c0_5] : memref<1x32xf32, #tpu.memory_space<vmem>>, vector<1x32xf32>
    %5 = vector.broadcast %4 : vector<1x32xf32> to vector<8x32xf32>
    %6 = arith.addf %3, %5 : vector<8x32xf32>
    %c0_6 = arith.constant 0 : index
    %c0_7 = arith.constant 0 : index
    %7 = vector.load %arg3[%c0_6, %c0_7] : memref<32x32xf32, #tpu.memory_space<vmem>>, vector<32x32xf32>
    %cst_8 = arith.constant dense<0.000000e+00> : vector<8x32xf32>
    %8 = tpu.matmul %1, %7, %cst_8 {dimension_numbers = #tpu.dot_dimension_numbers<[1], [0], [0], [1], [0, 0, 1, 1], [], []>} : vector<8x32xf32>, vector<32x32xf32>, vector<8x32xf32> -> vector<8x32xf32>
    %c0_9 = arith.constant 0 : index
    %c0_10 = arith.constant 0 : index
    %9 = vector.load %arg6[%c0_9, %c0_10] : memref<1x32xf32, #tpu.memory_space<vmem>>, vector<1x32xf32>
    %10 = vector.broadcast %9 : vector<1x32xf32> to vector<8x32xf32>
    %11 = arith.addf %8, %10 : vector<8x32xf32>
    %c0_11 = arith.constant 0 : index
    %c0_12 = arith.constant 0 : index
    %12 = vector.load %arg4[%c0_11, %c0_12] : memref<32x32xf32, #tpu.memory_space<vmem>>, vector<32x32xf32>
    %cst_13 = arith.constant dense<0.000000e+00> : vector<8x32xf32>
    %13 = tpu.matmul %1, %12, %cst_13 {dimension_numbers = #tpu.dot_dimension_numbers<[1], [0], [0], [1], [0, 0, 1, 1], [], []>} : vector<8x32xf32>, vector<32x32xf32>, vector<8x32xf32> -> vector<8x32xf32>
    %c0_14 = arith.constant 0 : index
    %c0_15 = arith.constant 0 : index
    %14 = vector.load %arg7[%c0_14, %c0_15] : memref<1x32xf32, #tpu.memory_space<vmem>>, vector<1x32xf32>
    %15 = vector.broadcast %14 : vector<1x32xf32> to vector<8x32xf32>
    %16 = arith.addf %13, %15 : vector<8x32xf32>
    %cst_16 = arith.constant 0.000000e+00 : f32
    %17 = vector.broadcast %cst_16 : f32 to vector<8x32xf32>
    %cst_17 = arith.constant 0.000000e+00 : f32
    %18 = vector.broadcast %cst_17 : f32 to vector<8x8xf32>
    %19 = vector.extract_strided_slice %6 {offsets = [0, 0], sizes = [8, 8], strides = [1, 1]} : vector<8x32xf32> to vector<8x8xf32>
    %20 = vector.extract_strided_slice %11 {offsets = [0, 0], sizes = [8, 8], strides = [1, 1]} : vector<8x32xf32> to vector<8x8xf32>
    %21 = vector.extract_strided_slice %16 {offsets = [0, 0], sizes = [8, 8], strides = [1, 1]} : vector<8x32xf32> to vector<8x8xf32>
    %22 = tpu.transpose %20, [1, 0] : vector<8x8xf32> -> vector<8x8xf32>
    %cst_18 = arith.constant dense<0.000000e+00> : vector<8x8xf32>
    %23 = tpu.matmul %19, %22, %cst_18 {dimension_numbers = #tpu.dot_dimension_numbers<[1], [0], [0], [1], [0, 0, 1, 1], [], []>} : vector<8x8xf32>, vector<8x8xf32>, vector<8x8xf32> -> vector<8x8xf32>
    %cst_19 = arith.constant 0.353553385 : f32
    %24 = vector.broadcast %cst_19 : f32 to vector<8x8xf32>
    %25 = arith.mulf %23, %24 : vector<8x8xf32>
    %cst_20 = arith.constant dense<0xFF800000> : vector<8xf32>
    %26 = vector.multi_reduction <maximumf>, %25, %cst_20 [1] : vector<8x8xf32> to vector<8xf32>
    %27 = vector.shape_cast %26 : vector<8xf32> to vector<8x1xf32>
    %28 = vector.broadcast %27 : vector<8x1xf32> to vector<8x8xf32>
    %29 = arith.subf %25, %28 : vector<8x8xf32>
    %30 = math.exp %29 : vector<8x8xf32>
    %cst_21 = arith.constant dense<0.000000e+00> : vector<8xf32>
    %31 = vector.multi_reduction <add>, %30, %cst_21 [1] : vector<8x8xf32> to vector<8xf32>
    %32 = vector.shape_cast %31 : vector<8xf32> to vector<8x1xf32>
    %33 = vector.broadcast %32 : vector<8x1xf32> to vector<8x8xf32>
    %34 = arith.divf %30, %33 : vector<8x8xf32>
    %35 = arith.addf %18, %34 : vector<8x8xf32>
    %cst_22 = arith.constant dense<0.000000e+00> : vector<8x8xf32>
    %36 = tpu.matmul %34, %21, %cst_22 {dimension_numbers = #tpu.dot_dimension_numbers<[1], [0], [0], [1], [0, 0, 1, 1], [], []>} : vector<8x8xf32>, vector<8x8xf32>, vector<8x8xf32> -> vector<8x8xf32>
    %c0_23 = arith.constant 0 : index
    %c0_24 = arith.constant 0 : index
    %37 = vector.load %arg8[%c0_23, %c0_24] : memref<32x32xf32, #tpu.memory_space<vmem>>, vector<8x32xf32>
    %cst_25 = arith.constant dense<0.000000e+00> : vector<8x32xf32>
    %38 = tpu.matmul %36, %37, %cst_25 {dimension_numbers = #tpu.dot_dimension_numbers<[1], [0], [0], [1], [0, 0, 1, 1], [], []>} : vector<8x8xf32>, vector<8x32xf32>, vector<8x32xf32> -> vector<8x32xf32>
    %39 = arith.addf %17, %38 : vector<8x32xf32>
    %40 = vector.extract_strided_slice %6 {offsets = [0, 8], sizes = [8, 8], strides = [1, 1]} : vector<8x32xf32> to vector<8x8xf32>
    %41 = vector.extract_strided_slice %11 {offsets = [0, 8], sizes = [8, 8], strides = [1, 1]} : vector<8x32xf32> to vector<8x8xf32>
    %42 = vector.extract_strided_slice %16 {offsets = [0, 8], sizes = [8, 8], strides = [1, 1]} : vector<8x32xf32> to vector<8x8xf32>
    %43 = tpu.transpose %41, [1, 0] : vector<8x8xf32> -> vector<8x8xf32>
    %cst_26 = arith.constant dense<0.000000e+00> : vector<8x8xf32>
    %44 = tpu.matmul %40, %43, %cst_26 {dimension_numbers = #tpu.dot_dimension_numbers<[1], [0], [0], [1], [0, 0, 1, 1], [], []>} : vector<8x8xf32>, vector<8x8xf32>, vector<8x8xf32> -> vector<8x8xf32>
    %cst_27 = arith.constant 0.353553385 : f32
    %45 = vector.broadcast %cst_27 : f32 to vector<8x8xf32>
    %46 = arith.mulf %44, %45 : vector<8x8xf32>
    %cst_28 = arith.constant dense<0xFF800000> : vector<8xf32>
    %47 = vector.multi_reduction <maximumf>, %46, %cst_28 [1] : vector<8x8xf32> to vector<8xf32>
    %48 = vector.shape_cast %47 : vector<8xf32> to vector<8x1xf32>
    %49 = vector.broadcast %48 : vector<8x1xf32> to vector<8x8xf32>
    %50 = arith.subf %46, %49 : vector<8x8xf32>
    %51 = math.exp %50 : vector<8x8xf32>
    %cst_29 = arith.constant dense<0.000000e+00> : vector<8xf32>
    %52 = vector.multi_reduction <add>, %51, %cst_29 [1] : vector<8x8xf32> to vector<8xf32>
    %53 = vector.shape_cast %52 : vector<8xf32> to vector<8x1xf32>
    %54 = vector.broadcast %53 : vector<8x1xf32> to vector<8x8xf32>
    %55 = arith.divf %51, %54 : vector<8x8xf32>
    %56 = arith.addf %35, %55 : vector<8x8xf32>
    %cst_30 = arith.constant dense<0.000000e+00> : vector<8x8xf32>
    %57 = tpu.matmul %55, %42, %cst_30 {dimension_numbers = #tpu.dot_dimension_numbers<[1], [0], [0], [1], [0, 0, 1, 1], [], []>} : vector<8x8xf32>, vector<8x8xf32>, vector<8x8xf32> -> vector<8x8xf32>
    %c8 = arith.constant 8 : index
    %c0_31 = arith.constant 0 : index
    %58 = vector.load %arg8[%c8, %c0_31] : memref<32x32xf32, #tpu.memory_space<vmem>>, vector<8x32xf32>
    %cst_32 = arith.constant dense<0.000000e+00> : vector<8x32xf32>
    %59 = tpu.matmul %57, %58, %cst_32 {dimension_numbers = #tpu.dot_dimension_numbers<[1], [0], [0], [1], [0, 0, 1, 1], [], []>} : vector<8x8xf32>, vector<8x32xf32>, vector<8x32xf32> -> vector<8x32xf32>
    %60 = arith.addf %39, %59 : vector<8x32xf32>
    %61 = vector.extract_strided_slice %6 {offsets = [0, 16], sizes = [8, 8], strides = [1, 1]} : vector<8x32xf32> to vector<8x8xf32>
    %62 = vector.extract_strided_slice %11 {offsets = [0, 16], sizes = [8, 8], strides = [1, 1]} : vector<8x32xf32> to vector<8x8xf32>
    %63 = vector.extract_strided_slice %16 {offsets = [0, 16], sizes = [8, 8], strides = [1, 1]} : vector<8x32xf32> to vector<8x8xf32>
    %64 = tpu.transpose %62, [1, 0] : vector<8x8xf32> -> vector<8x8xf32>
    %cst_33 = arith.constant dense<0.000000e+00> : vector<8x8xf32>
    %65 = tpu.matmul %61, %64, %cst_33 {dimension_numbers = #tpu.dot_dimension_numbers<[1], [0], [0], [1], [0, 0, 1, 1], [], []>} : vector<8x8xf32>, vector<8x8xf32>, vector<8x8xf32> -> vector<8x8xf32>
    %cst_34 = arith.constant 0.353553385 : f32
    %66 = vector.broadcast %cst_34 : f32 to vector<8x8xf32>
    %67 = arith.mulf %65, %66 : vector<8x8xf32>
    %cst_35 = arith.constant dense<0xFF800000> : vector<8xf32>
    %68 = vector.multi_reduction <maximumf>, %67, %cst_35 [1] : vector<8x8xf32> to vector<8xf32>
    %69 = vector.shape_cast %68 : vector<8xf32> to vector<8x1xf32>
    %70 = vector.broadcast %69 : vector<8x1xf32> to vector<8x8xf32>
    %71 = arith.subf %67, %70 : vector<8x8xf32>
    %72 = math.exp %71 : vector<8x8xf32>
    %cst_36 = arith.constant dense<0.000000e+00> : vector<8xf32>
    %73 = vector.multi_reduction <add>, %72, %cst_36 [1] : vector<8x8xf32> to vector<8xf32>
    %74 = vector.shape_cast %73 : vector<8xf32> to vector<8x1xf32>
    %75 = vector.broadcast %74 : vector<8x1xf32> to vector<8x8xf32>
    %76 = arith.divf %72, %75 : vector<8x8xf32>
    %77 = arith.addf %56, %76 : vector<8x8xf32>
    %cst_37 = arith.constant dense<0.000000e+00> : vector<8x8xf32>
    %78 = tpu.matmul %76, %63, %cst_37 {dimension_numbers = #tpu.dot_dimension_numbers<[1], [0], [0], [1], [0, 0, 1, 1], [], []>} : vector<8x8xf32>, vector<8x8xf32>, vector<8x8xf32> -> vector<8x8xf32>
    %c16 = arith.constant 16 : index
    %c0_38 = arith.constant 0 : index
    %79 = vector.load %arg8[%c16, %c0_38] : memref<32x32xf32, #tpu.memory_space<vmem>>, vector<8x32xf32>
    %cst_39 = arith.constant dense<0.000000e+00> : vector<8x32xf32>
    %80 = tpu.matmul %78, %79, %cst_39 {dimension_numbers = #tpu.dot_dimension_numbers<[1], [0], [0], [1], [0, 0, 1, 1], [], []>} : vector<8x8xf32>, vector<8x32xf32>, vector<8x32xf32> -> vector<8x32xf32>
    %81 = arith.addf %60, %80 : vector<8x32xf32>
    %82 = vector.extract_strided_slice %6 {offsets = [0, 24], sizes = [8, 8], strides = [1, 1]} : vector<8x32xf32> to vector<8x8xf32>
    %83 = vector.extract_strided_slice %11 {offsets = [0, 24], sizes = [8, 8], strides = [1, 1]} : vector<8x32xf32> to vector<8x8xf32>
    %84 = vector.extract_strided_slice %16 {offsets = [0, 24], sizes = [8, 8], strides = [1, 1]} : vector<8x32xf32> to vector<8x8xf32>
    %85 = tpu.transpose %83, [1, 0] : vector<8x8xf32> -> vector<8x8xf32>
    %cst_40 = arith.constant dense<0.000000e+00> : vector<8x8xf32>
    %86 = tpu.matmul %82, %85, %cst_40 {dimension_numbers = #tpu.dot_dimension_numbers<[1], [0], [0], [1], [0, 0, 1, 1], [], []>} : vector<8x8xf32>, vector<8x8xf32>, vector<8x8xf32> -> vector<8x8xf32>
    %cst_41 = arith.constant 0.353553385 : f32
    %87 = vector.broadcast %cst_41 : f32 to vector<8x8xf32>
    %88 = arith.mulf %86, %87 : vector<8x8xf32>
    %cst_42 = arith.constant dense<0xFF800000> : vector<8xf32>
    %89 = vector.multi_reduction <maximumf>, %88, %cst_42 [1] : vector<8x8xf32> to vector<8xf32>
    %90 = vector.shape_cast %89 : vector<8xf32> to vector<8x1xf32>
    %91 = vector.broadcast %90 : vector<8x1xf32> to vector<8x8xf32>
    %92 = arith.subf %88, %91 : vector<8x8xf32>
    %93 = math.exp %92 : vector<8x8xf32>
    %cst_43 = arith.constant dense<0.000000e+00> : vector<8xf32>
    %94 = vector.multi_reduction <add>, %93, %cst_43 [1] : vector<8x8xf32> to vector<8xf32>
    %95 = vector.shape_cast %94 : vector<8xf32> to vector<8x1xf32>
    %96 = vector.broadcast %95 : vector<8x1xf32> to vector<8x8xf32>
    %97 = arith.divf %93, %96 : vector<8x8xf32>
    %98 = arith.addf %77, %97 : vector<8x8xf32>
    %cst_44 = arith.constant dense<0.000000e+00> : vector<8x8xf32>
    %99 = tpu.matmul %97, %84, %cst_44 {dimension_numbers = #tpu.dot_dimension_numbers<[1], [0], [0], [1], [0, 0, 1, 1], [], []>} : vector<8x8xf32>, vector<8x8xf32>, vector<8x8xf32> -> vector<8x8xf32>
    %c24 = arith.constant 24 : index
    %c0_45 = arith.constant 0 : index
    %100 = vector.load %arg8[%c24, %c0_45] : memref<32x32xf32, #tpu.memory_space<vmem>>, vector<8x32xf32>
    %cst_46 = arith.constant dense<0.000000e+00> : vector<8x32xf32>
    %101 = tpu.matmul %99, %100, %cst_46 {dimension_numbers = #tpu.dot_dimension_numbers<[1], [0], [0], [1], [0, 0, 1, 1], [], []>} : vector<8x8xf32>, vector<8x32xf32>, vector<8x32xf32> -> vector<8x32xf32>
    %102 = arith.addf %81, %101 : vector<8x32xf32>
    %c0_47 = arith.constant 0 : index
    %c0_48 = arith.constant 0 : index
    %103 = vector.load %arg9[%c0_47, %c0_48] : memref<1x32xf32, #tpu.memory_space<vmem>>, vector<1x32xf32>
    %104 = vector.broadcast %103 : vector<1x32xf32> to vector<8x32xf32>
    %105 = arith.addf %102, %104 : vector<8x32xf32>
    %c0_49 = arith.constant 0 : index
    %c0_50 = arith.constant 0 : index
    %c0_51 = arith.constant 0 : index
    %106 = vector.load %arg10[%c0_49, %c0_50, %c0_51] : memref<1x8x32xf32, #tpu.memory_space<vmem>>, vector<1x8x32xf32>
    %107 = vector.shape_cast %106 : vector<1x8x32xf32> to vector<8x32xf32>
    %108 = vector.shape_cast %105 : vector<8x32xf32> to vector<1x8x32xf32>
    tpu.vector_store %arg10[%c0_49, %c0_50, %c0_51], %108 {strides = array<i32>} : memref<1x8x32xf32, #tpu.memory_space<vmem>>, vector<1x8x32xf32>,
    %cst_52 = arith.constant 2.500000e-01 : f32
    %109 = vector.broadcast %cst_52 : f32 to vector<8x8xf32>
    %110 = arith.mulf %98, %109 : vector<8x8xf32>
    %c0_53 = arith.constant 0 : index
    %c0_54 = arith.constant 0 : index
    %c0_55 = arith.constant 0 : index
    %111 = vector.load %arg11[%c0_53, %c0_54, %c0_55] : memref<1x8x8xf32, #tpu.memory_space<vmem>>, vector<1x8x8xf32>
    %112 = vector.shape_cast %111 : vector<1x8x8xf32> to vector<8x8xf32>
    %113 = vector.shape_cast %110 : vector<8x8xf32> to vector<1x8x8xf32>
    tpu.vector_store %arg11[%c0_53, %c0_54, %c0_55], %113 {strides = array<i32>} : memref<1x8x8xf32, #tpu.memory_space<vmem>>, vector<1x8x8xf32>,
    return
  }
  func.func @transform_0(%arg0: i32) -> (i32, i32, i32) {
    %c0_i32 = arith.constant 0 : i32
    %c0_i32_0 = arith.constant 0 : i32
    %c0_i32_1 = arith.constant 0 : i32
    return %arg0, %c0_i32, %c0_i32_0 : i32, i32, i32
  }
  func.func @transform_1(%arg0: i32) -> (i32, i32) {
    %c0_i32 = arith.constant 0 : i32
    %c0_i32_0 = arith.constant 0 : i32
    %c0_i32_1 = arith.constant 0 : i32
    return %c0_i32, %c0_i32_0 : i32, i32
  }
  func.func @transform_2(%arg0: i32) -> (i32, i32) {
    %c0_i32 = arith.constant 0 : i32
    %c0_i32_0 = arith.constant 0 : i32
    %c0_i32_1 = arith.constant 0 : i32
    return %c0_i32, %c0_i32_0 : i32, i32
  }
  func.func @transform_3(%arg0: i32) -> (i32, i32) {
    %c0_i32 = arith.constant 0 : i32
    %c0_i32_0 = arith.constant 0 : i32
    %c0_i32_1 = arith.constant 0 : i32
    return %c0_i32, %c0_i32_0 : i32, i32
  }
  func.func @transform_4(%arg0: i32) -> (i32, i32) {
    %c0_i32 = arith.constant 0 : i32
    %c0_i32_0 = arith.constant 0 : i32
    %c0_i32_1 = arith.constant 0 : i32
    return %c0_i32, %c0_i32_0 : i32, i32
  }
  func.func @transform_5(%arg0: i32) -> (i32, i32) {
    %c0_i32 = arith.constant 0 : i32
    %c0_i32_0 = arith.constant 0 : i32
    %c0_i32_1 = arith.constant 0 : i32
    return %c0_i32, %c0_i32_0 : i32, i32
  }
  func.func @transform_6(%arg0: i32) -> (i32, i32) {
    %c0_i32 = arith.constant 0 : i32
    %c0_i32_0 = arith.constant 0 : i32
    %c0_i32_1 = arith.constant 0 : i32
    return %c0_i32, %c0_i32_0 : i32, i32
  }
  func.func @transform_7(%arg0: i32) -> (i32, i32) {
    %c0_i32 = arith.constant 0 : i32
    %c0_i32_0 = arith.constant 0 : i32
    %c0_i32_1 = arith.constant 0 : i32
    return %c0_i32, %c0_i32_0 : i32, i32
  }
  func.func @transform_8(%arg0: i32) -> (i32, i32) {
    %c0_i32 = arith.constant 0 : i32
    %c0_i32_0 = arith.constant 0 : i32
    %c0_i32_1 = arith.constant 0 : i32
    return %c0_i32, %c0_i32_0 : i32, i32
  }
  func.func @transform_9(%arg0: i32) -> (i32, i32, i32) {
    %c0_i32 = arith.constant 0 : i32
    %c0_i32_0 = arith.constant 0 : i32
    %c0_i32_1 = arith.constant 0 : i32
    return %arg0, %c0_i32, %c0_i32_0 : i32, i32, i32
  }
  func.func @transform_10(%arg0: i32) -> (i32, i32, i32) {
    %c0_i32 = arith.constant 0 : i32
    %c0_i32_0 = arith.constant 0 : i32
    %c0_i32_1 = arith.constant 0 : i32
    return %arg0, %c0_i32, %c0_i32_0 : i32, i32, i32
  }
}

</mosaic_0001>

<llo_original>
// kernel: tpu_custom_call.1
$region0: #{tpu_custom_call.1}
  #allocation0 [shape = 'u32[]', space=smem, size = 0x4, offset = 0x4, fixed_abs, tag = 'smem constant byte address 0x4 - core index']
  #allocation1 [shape = 'u32[144,128]{1,0:T(1,128)}', space=vmem, size = 0x12000, scoped, tag = 'internal scratch']
  %s0 = inlined_call_operand.hbm [shape: f32[2,8,32], index: 0, kind: input, shape index: {}]
  %s1 = inlined_call_operand.hbm [shape: f32[32,32], index: 1, kind: input, shape index: {}]
  %s2 = inlined_call_operand.hbm [shape: f32[32,32], index: 2, kind: input, shape index: {}]
  %s3 = inlined_call_operand.hbm [shape: f32[32,32], index: 3, kind: input, shape index: {}]
  %s4 = inlined_call_operand.vmem [shape: f32[1,32], index: 4, kind: input, shape index: {}]
  %s5 = inlined_call_operand.vmem [shape: f32[1,32], index: 5, kind: input, shape index: {}]
  %s6 = inlined_call_operand.vmem [shape: f32[1,32], index: 6, kind: input, shape index: {}]
  %s7 = inlined_call_operand.hbm [shape: f32[32,32], index: 7, kind: input, shape index: {}]
  %s8 = inlined_call_operand.vmem [shape: f32[1,32], index: 8, kind: input, shape index: {}]
  %s9 = inlined_call_operand.hbm [shape: f32[2,8,32], index: 9, kind: output, shape index: {0}]
  %s10 = inlined_call_operand.hbm [shape: f32[2,8,8], index: 10, kind: output, shape index: {1}]
  %11 = xla_tuple %s9, %s10
  %s12 = sld [smem:[#allocation0]]
  $region97: #{tpu_custom_call.1} parent=0
    _
  %s14 = ssub.s32 1, %s12
  %s15 = scalar_select 0, %s14, %s12
  $region1: #{tpu_custom_call.1} parent=0
    #allocation2 [shape = 'u8[8192]{0}', space=vmem, size = 0x2000, scoped, tag = 'input window, operand 0']
    #allocation3 [shape = 's32[2]{0}', space=sflag, size = 0x8, scoped, tag = 'scoped memory for tpu_custom_call.1']
    #allocation4 [shape = 's32[2]{0}', space=sflag, size = 0x8, scoped, tag = 'scoped memory for tpu_custom_call.1']
    #allocation5 [shape = 'u8[16384]{0}', space=vmem, size = 0x4000, scoped, tag = 'input window, operand 1, single buffered']
    #allocation6 [shape = 's32[1]{0}', space=sflag, size = 0x4, scoped, tag = 'scoped memory for tpu_custom_call.1']
    #allocation7 [shape = 'u8[16384]{0}', space=vmem, size = 0x4000, scoped, tag = 'input window, operand 2, single buffered']
    #allocation8 [shape = 'u8[16384]{0}', space=vmem, size = 0x4000, scoped, tag = 'input window, operand 3, single buffered']
    #allocation9 [shape = 's32[1]{0}', space=sflag, size = 0x4, scoped, tag = 'scoped memory for tpu_custom_call.1']
    #allocation10 [shape = 'u8[16384]{0}', space=vmem, size = 0x4000, scoped, tag = 'input window, operand 7, single buffered']
    #allocation11 [shape = 'u8[8192]{0}', space=vmem, size = 0x2000, scoped, tag = 'output window, operand 0']
    #allocation12 [shape = 'u8[8192]{0}', space=vmem, size = 0x2000, scoped, tag = 'output window, operand 1']
    #allocation13 [shape = 's32[2]{0}', space=sflag, size = 0x8, scoped, tag = 'scoped memory for tpu_custom_call.1']
    %16 = vsyncpa [#allocation3], 0
    %s17 = scalar_lea.sflag [#allocation3], 1
    %18 = vsyncpa %s17, 0
    %19 = vsyncpa [#allocation6], 0
    %20 = vsyncpa [#allocation9], 0
    %21 = vsyncpa [#allocation4], 0
    %s22 = scalar_lea.sflag [#allocation4], 1
    %23 = vsyncpa %s22, 0
    %24 = vsyncpa [#allocation13], 0
    %s25 = scalar_lea.sflag [#allocation13], 1
    %26 = vsyncpa %s25, 0
    loop: start=0, step=1, limit=4
    $region2: #{tpu_custom_call.1} parent=1 // loop_pre_header
      _
    $region3: #{tpu_custom_call.1} parent=1 // loop_header
      %s28 = sphi 0, %s32
      %p29 = scmp.ge.s32.totalorder %s28, 4
      %s38 = sphi 0, %s40
      %s41 = sphi 0, %s38
      %s42 = sphi 0, %s41
      %s58 = sphi 0, %s42
      %s62 = sphi 0, %s62
      %s64 = sphi 0, %s62
      %s65 = sphi 0, %s64
      %s79 = sphi 0, %s65
      %s83 = sphi 0, %s83
      %s85 = sphi 0, %s83
      %s86 = sphi 0, %s85
      %s100 = sphi 0, %s86
      %s104 = sphi 0, %s104
      %s106 = sphi 0, %s104
      %s107 = sphi 0, %s106
      %s121 = sphi 0, %s107
      %s125 = sphi 0, %s125
      %s127 = sphi 0, %s125
      %s128 = sphi 0, %s127
      %s142 = sphi 0, %s128
      %s146 = sphi 0, %s146
      %s148 = sphi 0, %s146
      %s149 = sphi 0, %s148
      %s163 = sphi 0, %s149
      %s167 = sphi 0, %s167
      %s169 = sphi 0, %s167
      %s170 = sphi 0, %s169
      %s184 = sphi 0, %s170
      %s188 = sphi 0, %s188
      %s190 = sphi 0, %s188
      %s191 = sphi 0, %s190
      %s205 = sphi 0, %s191
      %s209 = sphi 0, %s209
      %s211 = sphi 0, %s209
      %s212 = sphi 0, %s211
      %s226 = sphi 0, %s212
      %s232 = sphi 0, %s234
      %s235 = sphi 0, %s232
      %s236 = sphi 0, %s235
      %s252 = sphi 0, %s236
      %s258 = sphi 0, %s260
      %s261 = sphi 0, %s258
      %s262 = sphi 0, %s261
      %s278 = sphi 0, %s262
    $region4: #{tpu_custom_call.1} parent=1 // loop_header_branch
      %31 = sbr.rel (%p29) target = $region8
    $region5: #{tpu_custom_call.1} parent=1 // loop_body
      %s33 = ssub.s32 %s28, 1
      %s34 = ssub.s32 %s28, 2
      %s35 = sadd.s32 %s28, 1
      %s36 = ssub.s32 %s28, %s35
      %p37 = scmp.eq.s32.totalorder %s36, 0
      %s39 = sadd.s32 %s38, 1
      %s40 = scalar_select %p37, %s38, %s39
      %p43 = pneg %p37
      %p44 = scmp.eq.s32.totalorder %s28, 1
      %p45 = por %p43, %p44
      %p46 = scmp.ne.s32.totalorder %s38, %s41
      %p47 = scmp.eq.s32.totalorder %s28, 0
      %p48 = por %p46, %p47
      %p49 = scmp.ne.s32.totalorder %s38, %s41
      %p50 = scmp.eq.s32.totalorder %s33, 1
      %p51 = por %p49, %p50
      %p52 = scmp.ne.s32.totalorder %s41, %s42
      %p53 = scmp.eq.s32.totalorder %s33, 0
      %p54 = por %p52, %p53
      %p55 = scmp.ne.s32.totalorder %s41, %s42
      %p56 = scmp.eq.s32.totalorder %s34, 1
      %p57 = por %p55, %p56
      %p59 = scmp.ne.s32.totalorder %s42, %s58
      %p60 = scmp.eq.s32.totalorder %s34, 0
      %p61 = por %p59, %p60
      %s63 = sadd.s32 %s62, 1
      %p66 = scmp.eq.s32.totalorder %s28, 1
      %p67 = scmp.ne.s32.totalorder %s62, %s64
      %p68 = scmp.eq.s32.totalorder %s28, 0
      %p69 = por %p67, %p68
      %p70 = scmp.ne.s32.totalorder %s62, %s64
      %p71 = scmp.eq.s32.totalorder %s33, 1
      %p72 = por %p70, %p71
      %p73 = scmp.ne.s32.totalorder %s64, %s65
      %p74 = scmp.eq.s32.totalorder %s33, 0
      %p75 = por %p73, %p74
      %p76 = scmp.ne.s32.totalorder %s64, %s65
      %p77 = scmp.eq.s32.totalorder %s34, 1
      %p78 = por %p76, %p77
      %p80 = scmp.ne.s32.totalorder %s65, %s79
      %p81 = scmp.eq.s32.totalorder %s34, 0
      %p82 = por %p80, %p81
      %s84 = sadd.s32 %s83, 1
      %p87 = scmp.eq.s32.totalorder %s28, 1
      %p88 = scmp.ne.s32.totalorder %s83, %s85
      %p89 = scmp.eq.s32.totalorder %s28, 0
      %p90 = por %p88, %p89
      %p91 = scmp.ne.s32.totalorder %s83, %s85
      %p92 = scmp.eq.s32.totalorder %s33, 1
      %p93 = por %p91, %p92
      %p94 = scmp.ne.s32.totalorder %s85, %s86
      %p95 = scmp.eq.s32.totalorder %s33, 0
      %p96 = por %p94, %p95
      %p97 = scmp.ne.s32.totalorder %s85, %s86
      %p98 = scmp.eq.s32.totalorder %s34, 1
      %p99 = por %p97, %p98
      %p101 = scmp.ne.s32.totalorder %s86, %s100
      %p102 = scmp.eq.s32.totalorder %s34, 0
      %p103 = por %p101, %p102
      %s105 = sadd.s32 %s104, 1
      %p108 = scmp.eq.s32.totalorder %s28, 1
      %p109 = scmp.ne.s32.totalorder %s104, %s106
      %p110 = scmp.eq.s32.totalorder %s28, 0
      %p111 = por %p109, %p110
      %p112 = scmp.ne.s32.totalorder %s104, %s106
      %p113 = scmp.eq.s32.totalorder %s33, 1
      %p114 = por %p112, %p113
      %p115 = scmp.ne.s32.totalorder %s106, %s107
      %p116 = scmp.eq.s32.totalorder %s33, 0
      %p117 = por %p115, %p116
      %p118 = scmp.ne.s32.totalorder %s106, %s107
      %p119 = scmp.eq.s32.totalorder %s34, 1
      %p120 = por %p118, %p119
      %p122 = scmp.ne.s32.totalorder %s107, %s121
      %p123 = scmp.eq.s32.totalorder %s34, 0
      %p124 = por %p122, %p123
      %s126 = sadd.s32 %s125, 1
      %p129 = scmp.eq.s32.totalorder %s28, 1
      %p130 = scmp.ne.s32.totalorder %s125, %s127
      %p131 = scmp.eq.s32.totalorder %s28, 0
      %p132 = por %p130, %p131
      %p133 = scmp.ne.s32.totalorder %s125, %s127
      %p134 = scmp.eq.s32.totalorder %s33, 1
      %p135 = por %p133, %p134
      %p136 = scmp.ne.s32.totalorder %s127, %s128
      %p137 = scmp.eq.s32.totalorder %s33, 0
      %p138 = por %p136, %p137
      %p139 = scmp.ne.s32.totalorder %s127, %s128
      %p140 = scmp.eq.s32.totalorder %s34, 1
      %p141 = por %p139, %p140
      %p143 = scmp.ne.s32.totalorder %s128, %s142
      %p144 = scmp.eq.s32.totalorder %s34, 0
      %p145 = por %p143, %p144
      %s147 = sadd.s32 %s146, 1
      %p150 = scmp.eq.s32.totalorder %s28, 1
      %p151 = scmp.ne.s32.totalorder %s146, %s148
      %p152 = scmp.eq.s32.totalorder %s28, 0
      %p153 = por %p151, %p152
      %p154 = scmp.ne.s32.totalorder %s146, %s148
      %p155 = scmp.eq.s32.totalorder %s33, 1
      %p156 = por %p154, %p155
      %p157 = scmp.ne.s32.totalorder %s148, %s149
      %p158 = scmp.eq.s32.totalorder %s33, 0
      %p159 = por %p157, %p158
      %p160 = scmp.ne.s32.totalorder %s148, %s149
      %p161 = scmp.eq.s32.totalorder %s34, 1
      %p162 = por %p160, %p161
      %p164 = scmp.ne.s32.totalorder %s149, %s163
      %p165 = scmp.eq.s32.totalorder %s34, 0
      %p166 = por %p164, %p165
      %s168 = sadd.s32 %s167, 1
      %p171 = scmp.eq.s32.totalorder %s28, 1
      %p172 = scmp.ne.s32.totalorder %s167, %s169
      %p173 = scmp.eq.s32.totalorder %s28, 0
      %p174 = por %p172, %p173
      %p175 = scmp.ne.s32.totalorder %s167, %s169
      %p176 = scmp.eq.s32.totalorder %s33, 1
      %p177 = por %p175, %p176
      %p178 = scmp.ne.s32.totalorder %s169, %s170
      %p179 = scmp.eq.s32.totalorder %s33, 0
      %p180 = por %p178, %p179
      %p181 = scmp.ne.s32.totalorder %s169, %s170
      %p182 = scmp.eq.s32.totalorder %s34, 1
      %p183 = por %p181, %p182
      %p185 = scmp.ne.s32.totalorder %s170, %s184
      %p186 = scmp.eq.s32.totalorder %s34, 0
      %p187 = por %p185, %p186
      %s189 = sadd.s32 %s188, 1
      %p192 = scmp.eq.s32.totalorder %s28, 1
      %p193 = scmp.ne.s32.totalorder %s188, %s190
      %p194 = scmp.eq.s32.totalorder %s28, 0
      %p195 = por %p193, %p194
      %p196 = scmp.ne.s32.totalorder %s188, %s190
      %p197 = scmp.eq.s32.totalorder %s33, 1
      %p198 = por %p196, %p197
      %p199 = scmp.ne.s32.totalorder %s190, %s191
      %p200 = scmp.eq.s32.totalorder %s33, 0
      %p201 = por %p199, %p200
      %p202 = scmp.ne.s32.totalorder %s190, %s191
      %p203 = scmp.eq.s32.totalorder %s34, 1
      %p204 = por %p202, %p203
      %p206 = scmp.ne.s32.totalorder %s191, %s205
      %p207 = scmp.eq.s32.totalorder %s34, 0
      %p208 = por %p206, %p207
      %s210 = sadd.s32 %s209, 1
      %p213 = scmp.eq.s32.totalorder %s28, 1
      %p214 = scmp.ne.s32.totalorder %s209, %s211
      %p215 = scmp.eq.s32.totalorder %s28, 0
      %p216 = por %p214, %p215
      %p217 = scmp.ne.s32.totalorder %s209, %s211
      %p218 = scmp.eq.s32.totalorder %s33, 1
      %p219 = por %p217, %p218
      %p220 = scmp.ne.s32.totalorder %s211, %s212
      %p221 = scmp.eq.s32.totalorder %s33, 0
      %p222 = por %p220, %p221
      %p223 = scmp.ne.s32.totalorder %s211, %s212
      %p224 = scmp.eq.s32.totalorder %s34, 1
      %p225 = por %p223, %p224
      %p227 = scmp.ne.s32.totalorder %s212, %s226
      %p228 = scmp.eq.s32.totalorder %s34, 0
      %p229 = por %p227, %p228
      %s230 = ssub.s32 %s28, %s35
      %p231 = scmp.eq.s32.totalorder %s230, 0
      %s233 = sadd.s32 %s232, 1
      %s234 = scalar_select %p231, %s232, %s233
      %p237 = pneg %p231
      %p238 = scmp.eq.s32.totalorder %s28, 1
      %p239 = por %p237, %p238
      %p240 = scmp.ne.s32.totalorder %s232, %s235
      %p241 = scmp.eq.s32.totalorder %s28, 0
      %p242 = por %p240, %p241
      %p243 = scmp.ne.s32.totalorder %s232, %s235
      %p244 = scmp.eq.s32.totalorder %s33, 1
      %p245 = por %p243, %p244
      %p246 = scmp.ne.s32.totalorder %s235, %s236
      %p247 = scmp.eq.s32.totalorder %s33, 0
      %p248 = por %p246, %p247
      %p249 = scmp.ne.s32.totalorder %s235, %s236
      %p250 = scmp.eq.s32.totalorder %s34, 1
      %p251 = por %p249, %p250
      %p253 = scmp.ne.s32.totalorder %s236, %s252
      %p254 = scmp.eq.s32.totalorder %s34, 0
      %p255 = por %p253, %p254
      %s256 = ssub.s32 %s28, %s35
      %p257 = scmp.eq.s32.totalorder %s256, 0
      %s259 = sadd.s32 %s258, 1
      %s260 = scalar_select %p257, %s258, %s259
      %p263 = pneg %p257
      %p264 = scmp.eq.s32.totalorder %s28, 1
      %p265 = por %p263, %p264
      %p266 = scmp.ne.s32.totalorder %s258, %s261
      %p267 = scmp.eq.s32.totalorder %s28, 0
      %p268 = por %p266, %p267
      %p269 = scmp.ne.s32.totalorder %s258, %s261
      %p270 = scmp.eq.s32.totalorder %s33, 1
      %p271 = por %p269, %p270
      %p272 = scmp.ne.s32.totalorder %s261, %s262
      %p273 = scmp.eq.s32.totalorder %s33, 0
      %p274 = por %p272, %p273
      %p275 = scmp.ne.s32.totalorder %s261, %s262
      %p276 = scmp.eq.s32.totalorder %s34, 1
      %p277 = por %p275, %p276
      %p279 = scmp.ne.s32.totalorder %s262, %s278
      %p280 = scmp.eq.s32.totalorder %s34, 0
      %p281 = por %p279, %p280
      %p282 = scmp.le.s32.totalorder 1, %s28
      %p283 = scmp.lt.s32.totalorder %s28, 3
      %p284 = pnand %p282, %p283
      %p285 = pneg %p284
      // Predicated region
      $region9: #{tpu_custom_call.1} parent=5 // pred_check
        _
      $region10: #{tpu_custom_call.1} parent=5 // pred_check_branch
        %287 = sbr.rel (%p284) target = $region12
      $region11: #{tpu_custom_call.1} parent=5 // pred_region
        %s288 = ssub.s32 %s28, 1
        // Predicated region
        $region13: #{tpu_custom_call.1} parent=11 // pred_check
          %p289 = pneg %p75
        $region14: #{tpu_custom_call.1} parent=11 // pred_check_branch
          %291 = sbr.rel (%p289) target = $region16
        $region15: #{tpu_custom_call.1} parent=11 // pred_region
          %s293 = ssub.s32 512, 512
          %294 = vsyncadd [#allocation6], %s293
          %s295 = sshll.u32 [#allocation5], 4
          %s296 = int_to_ptr.vmem [resolvable:$true] %s295
          %301 = dma.hbm_to_vmem [thread:$0]  %s1, 512, %s296, [#allocation6], 128, 128, 8
        $region16: #{tpu_custom_call.1} parent=11 // pred_fallthru
          _
        // Predicated region
        $region17: #{tpu_custom_call.1} parent=11 // pred_check
          %p302 = pneg %p96
        $region18: #{tpu_custom_call.1} parent=11 // pred_check_branch
          %304 = sbr.rel (%p302) target = $region20
        $region19: #{tpu_custom_call.1} parent=11 // pred_region
          %s306 = ssub.s32 512, 512
          %307 = vsyncadd [#allocation6], %s306
          %s308 = sshll.u32 [#allocation7], 4
          %s309 = int_to_ptr.vmem [resolvable:$true] %s308
          %314 = dma.hbm_to_vmem [thread:$0]  %s2, 512, %s309, [#allocation6], 128, 128, 8
        $region20: #{tpu_custom_call.1} parent=11 // pred_fallthru
          _
        // Predicated region
        $region21: #{tpu_custom_call.1} parent=11 // pred_check
          %p315 = pneg %p117
        $region22: #{tpu_custom_call.1} parent=11 // pred_check_branch
          %317 = sbr.rel (%p315) target = $region24
        $region23: #{tpu_custom_call.1} parent=11 // pred_region
          %s319 = ssub.s32 512, 512
          %320 = vsyncadd [#allocation9], %s319
          %s321 = sshll.u32 [#allocation8], 4
          %s322 = int_to_ptr.vmem [resolvable:$true] %s321
          %327 = dma.hbm_to_vmem [thread:$0]  %s3, 512, %s322, [#allocation9], 128, 128, 8
        $region24: #{tpu_custom_call.1} parent=11 // pred_fallthru
          _
        // Predicated region
        $region25: #{tpu_custom_call.1} parent=11 // pred_check
          %p328 = pneg %p138
        $region26: #{tpu_custom_call.1} parent=11 // pred_check_branch
          %330 = sbr.rel (%p328) target = $region28
        $region27: #{tpu_custom_call.1} parent=11 // pred_region
          _
        $region28: #{tpu_custom_call.1} parent=11 // pred_fallthru
          _
        // Predicated region
        $region29: #{tpu_custom_call.1} parent=11 // pred_check
          %p331 = pneg %p159
        $region30: #{tpu_custom_call.1} parent=11 // pred_check_branch
          %333 = sbr.rel (%p331) target = $region32
        $region31: #{tpu_custom_call.1} parent=11 // pred_region
          _
        $region32: #{tpu_custom_call.1} parent=11 // pred_fallthru
          _
        // Predicated region
        $region33: #{tpu_custom_call.1} parent=11 // pred_check
          %p334 = pneg %p180
        $region34: #{tpu_custom_call.1} parent=11 // pred_check_branch
          %336 = sbr.rel (%p334) target = $region36
        $region35: #{tpu_custom_call.1} parent=11 // pred_region
          _
        $region36: #{tpu_custom_call.1} parent=11 // pred_fallthru
          _
        // Predicated region
        $region37: #{tpu_custom_call.1} parent=11 // pred_check
          %p337 = pneg %p201
        $region38: #{tpu_custom_call.1} parent=11 // pred_check_branch
          %339 = sbr.rel (%p337) target = $region40
        $region39: #{tpu_custom_call.1} parent=11 // pred_region
          %s341 = ssub.s32 512, 512
          %342 = vsyncadd [#allocation9], %s341
          %s343 = sshll.u32 [#allocation10], 4
          %s344 = int_to_ptr.vmem [resolvable:$true] %s343
          %349 = dma.hbm_to_vmem [thread:$0]  %s7, 512, %s344, [#allocation9], 128, 128, 8
        $region40: #{tpu_custom_call.1} parent=11 // pred_fallthru
          _
        // Predicated region
        $region41: #{tpu_custom_call.1} parent=11 // pred_check
          %p350 = pneg %p222
        $region42: #{tpu_custom_call.1} parent=11 // pred_check_branch
          %352 = sbr.rel (%p350) target = $region44
        $region43: #{tpu_custom_call.1} parent=11 // pred_region
          _
        $region44: #{tpu_custom_call.1} parent=11 // pred_fallthru
          _
      $region12: #{tpu_custom_call.1} parent=5 // pred_fallthru
        _
      %p353 = scmp.lt.s32.totalorder %s28, 2
      // Predicated region
      $region45: #{tpu_custom_call.1} parent=5 // pred_check
        %p354 = pneg %p353
      $region46: #{tpu_custom_call.1} parent=5 // pred_check_branch
        %356 = sbr.rel (%p354) target = $region48
      $region47: #{tpu_custom_call.1} parent=5 // pred_region
        // Predicated region
        $region49: #{tpu_custom_call.1} parent=47 // pred_check
          %p357 = pneg %p48
        $region50: #{tpu_custom_call.1} parent=47 // pred_check_branch
          %359 = sbr.rel (%p357) target = $region52
        $region51: #{tpu_custom_call.1} parent=47 // pred_region
          %s360 = sand.u32 %s38, 1
          %s361 = scalar_lea.sflag [#allocation3], %s360
          %s362 = sand.u32 %s38, 1
          %s363 = smul.addr %s362, 8
          %s364 = scalar_lea.vmem [#allocation2], %s363
          %s366 = ssub.s32 128, 128
          %367 = vsyncadd %s361, %s366
          %s368 = smul.addr %s28, 128
          %s369 = scalar_lea.hbm %s0, %s368
          %s371 = sshll.u32 %s364, 4
          %s372 = int_to_ptr.vmem [resolvable:$true] %s371
          %374 = dma.hbm_to_vmem [thread:$0]  %s369, 128, %s372, %s361
        $region52: #{tpu_custom_call.1} parent=47 // pred_fallthru
          _
      $region48: #{tpu_custom_call.1} parent=5 // pred_fallthru
        _
      %p375 = scmp.le.s32.totalorder 1, %s28
      %p376 = scmp.lt.s32.totalorder %s28, 3
      %p377 = pnand %p375, %p376
      %p378 = pneg %p377
      // Predicated region
      $region53: #{tpu_custom_call.1} parent=5 // pred_check
        _
      $region54: #{tpu_custom_call.1} parent=5 // pred_check_branch
        %380 = sbr.rel (%p377) target = $region56
      $region55: #{tpu_custom_call.1} parent=5 // pred_region
        %s381 = ssub.s32 %s28, 1
        %s382 = sand.u32 %s41, 1
        %s383 = scalar_lea.sflag [#allocation3], %s382
        %s384 = sand.u32 %s41, 1
        %s385 = smul.addr %s384, 8
        %s386 = scalar_lea.vmem [#allocation2], %s385
        // Predicated region
        $region57: #{tpu_custom_call.1} parent=55 // pred_check
          %p387 = pneg %p54
        $region58: #{tpu_custom_call.1} parent=55 // pred_check_branch
          %389 = sbr.rel (%p387) target = $region60
        $region59: #{tpu_custom_call.1} parent=55 // pred_region
          %390 = dma.done %s383, 128
        $region60: #{tpu_custom_call.1} parent=55 // pred_fallthru
          _
        // Predicated region
        $region61: #{tpu_custom_call.1} parent=55 // pred_check
          %p391 = pneg %p75
        $region62: #{tpu_custom_call.1} parent=55 // pred_check_branch
          %393 = sbr.rel (%p391) target = $region64
        $region63: #{tpu_custom_call.1} parent=55 // pred_region
          %394 = dma.done [#allocation6], 512
        $region64: #{tpu_custom_call.1} parent=55 // pred_fallthru
          _
        // Predicated region
        $region65: #{tpu_custom_call.1} parent=55 // pred_check
          %p395 = pneg %p96
        $region66: #{tpu_custom_call.1} parent=55 // pred_check_branch
          %397 = sbr.rel (%p395) target = $region68
        $region67: #{tpu_custom_call.1} parent=55 // pred_region
          %398 = dma.done [#allocation6], 512
        $region68: #{tpu_custom_call.1} parent=55 // pred_fallthru
          _
        // Predicated region
        $region69: #{tpu_custom_call.1} parent=55 // pred_check
          %p399 = pneg %p117
        $region70: #{tpu_custom_call.1} parent=55 // pred_check_branch
          %401 = sbr.rel (%p399) target = $region72
        $region71: #{tpu_custom_call.1} parent=55 // pred_region
          %402 = dma.done [#allocation9], 512
        $region72: #{tpu_custom_call.1} parent=55 // pred_fallthru
          _
        // Predicated region
        $region73: #{tpu_custom_call.1} parent=55 // pred_check
          %p403 = pneg %p201
        $region74: #{tpu_custom_call.1} parent=55 // pred_check_branch
          %405 = sbr.rel (%p403) target = $region76
        $region75: #{tpu_custom_call.1} parent=55 // pred_region
          %406 = dma.done [#allocation9], 512
        $region76: #{tpu_custom_call.1} parent=55 // pred_fallthru
          _
        %s407 = sand.u32 %s41, 1
        %s408 = scalar_lea.sflag [#allocation3], %s407
        %s409 = sand.u32 %s41, 1
        %s410 = smul.addr %s409, 8
        %s411 = scalar_lea.vmem [#allocation2], %s410
        %p412 = pneg %p54
        %p413 = pneg %p51
        %p414 = pneg %p75
        %p415 = pneg %p72
        %p416 = pneg %p96
        %p417 = pneg %p93
        %p418 = pneg %p117
        %p419 = pneg %p114
        %p420 = pneg %p138
        %p421 = pneg %p135
        %p422 = pneg %p159
        %p423 = pneg %p156
        %p424 = pneg %p180
        %p425 = pneg %p177
        %p426 = pneg %p201
        %p427 = pneg %p198
        %p428 = pneg %p222
        %p429 = pneg %p219
        %p430 = pneg %p248
        %p431 = pneg %p245
        %s432 = sand.u32 %s235, 1
        %s433 = scalar_lea.sflag [#allocation4], %s432
        %s434 = sand.u32 %s235, 1
        %s435 = smul.addr %s434, 8
        %s436 = scalar_lea.vmem [#allocation11], %s435
        %p437 = pneg %p274
        %p438 = pneg %p271
        %s439 = sand.u32 %s261, 1
        %s440 = scalar_lea.sflag [#allocation13], %s439
        %s441 = sand.u32 %s261, 1
        %s442 = smul.addr %s441, 8
        %s443 = scalar_lea.vmem [#allocation12], %s442
        %v444 = vld [vmem:[%s386] sm:$0xff]
        %v445 = vld [vmem:[#allocation5] sm:$0xff]
        %v446 = vld [vmem:[#allocation5 + $0x8] sm:$0xff]
        %v447 = vld [vmem:[#allocation5 + $0x10] sm:$0xff]
        %v448 = vld [vmem:[#allocation5 + $0x18] sm:$0xff]
        %v449 = vld [vmem:[%s4] sm:$0x1]
        %v451 = vlaneseq
        %v452 = vshrl.u32 %v451, 7
        %v453 = vsub.s32 0, %v452
        %v454 = vrot.slane %v449, %v453
        %vm456 = vcmask 261120
        %v458 = vsel %vm456, %v444, 0
        %460 = vmatprep.subr.mxu0 0.0
        %461 = vmatpush1.msra.mxu0 0.0
        %462 = vmatprep.subr.mxu0 0.0
        %463 = vmatpush1.msra.mxu0 0.0
        %464 = vmatprep.subr.mxu0 0.0
        %465 = vmatpush1.msra.mxu0 0.0
        %466 = vmatprep.subr.mxu0 0.0
        %467 = vmatpush1.msra.mxu0 0.0
        %468 = vmatprep.subr.mxu0 0.0
        %469 = vmatpush1.msra.mxu0 0.0
        %470 = vmatprep.subr.mxu0 0.0
        %471 = vmatpush1.msra.mxu0 0.0
        %472 = vmatprep.subr.mxu0 0.0
        %473 = vmatpush1.msra.mxu0 0.0
        %474 = vmatprep.subr.mxu0 0.0
        %475 = vmatpush1.msra.mxu0 0.0
        %476 = vmatprep.subr.mxu0 0.0
        %477 = vmatpush1.msra.mxu0 0.0
        %478 = vmatprep.subr.mxu0 0.0
        %479 = vmatpush1.msra.mxu0 0.0
        %480 = vmatprep.subr.mxu0 0.0
        %481 = vmatpush1.msra.mxu0 0.0
        %482 = vmatprep.subr.mxu0 0.0
        %483 = vmatpush1.msra.mxu0 0.0
        %484 = vmatprep.subr.mxu0 0.0
        %485 = vmatpush1.msra.mxu0 %v448
        %486 = vmatprep.subr.mxu0 0.0
        %487 = vmatpush1.msra.mxu0 %v447
        %488 = vmatprep.subr.mxu0 0.0
        %489 = vmatpush1.msra.mxu0 %v446
        %490 = vmatprep.subr.mxu0 0.0
        %491 = vmatpush1.msra.mxu0 %v445
        %492 = vmatprep.subr.mxu0 0.0
        %493 = vmatpush2.msra.mxu0 0.0
        %494 = vmatprep.subr.mxu0 0.0
        %495 = vmatpush2.msra.mxu0 0.0
        %496 = vmatprep.subr.mxu0 0.0
        %497 = vmatpush2.msra.mxu0 0.0
        %498 = vmatprep.subr.mxu0 0.0
        %499 = vmatpush2.msra.mxu0 0.0
        %500 = vmatprep.subr.mxu0 0.0
        %501 = vmatpush2.msra.mxu0 0.0
        %502 = vmatprep.subr.mxu0 0.0
        %503 = vmatpush2.msra.mxu0 0.0
        %504 = vmatprep.subr.mxu0 0.0
        %505 = vmatpush2.msra.mxu0 0.0
        %506 = vmatprep.subr.mxu0 0.0
        %507 = vmatpush2.msra.mxu0 0.0
        %508 = vmatprep.subr.mxu0 0.0
        %509 = vmatpush2.msra.mxu0 0.0
        %510 = vmatprep.subr.mxu0 0.0
        %511 = vmatpush2.msra.mxu0 0.0
        %512 = vmatprep.subr.mxu0 0.0
        %513 = vmatpush2.msra.mxu0 0.0
        %514 = vmatprep.subr.mxu0 0.0
        %515 = vmatpush2.msra.mxu0 0.0
        %516 = vmatprep.subr.mxu0 0.0
        %517 = vmatpush2.msra.mxu0 0.0
        %518 = vmatprep.subr.mxu0 0.0
        %519 = vmatpush2.msra.mxu0 0.0
        %520 = vmatprep.subr.mxu0 0.0
        %521 = vmatpush2.msra.mxu0 0.0
        %522 = vmatprep.subr.mxu0 0.0
        %523 = vmatpush2.msra.mxu0 0.0
        %524 = vmatprep.mubr.f32.mxu0 0.0
        %525 = vmatmul.mubr.f32.gmra.mxu0 %v458
        %v526 = vpop.f32.mrf.mxu0
        %v527 = vadd.f32 %v454, %v526
        %v528 = vpop.f32.mrf.mxu0
        %529 = vdwg.mxu0
        %v530 = vld [vmem:[#allocation7] sm:$0xff]
        %v531 = vld [vmem:[#allocation7 + $0x8] sm:$0xff]
        %v532 = vld [vmem:[#allocation7 + $0x10] sm:$0xff]
        %v533 = vld [vmem:[#allocation7 + $0x18] sm:$0xff]
        %v534 = vld [vmem:[%s5] sm:$0x1]
        %v536 = vlaneseq
        %v537 = vshrl.u32 %v536, 7
        %v538 = vsub.s32 0, %v537
        %v539 = vrot.slane %v534, %v538
        %541 = vmatprep.subr.mxu0 0.0
        %542 = vmatpush1.msra.mxu0 0.0
        %543 = vmatprep.subr.mxu0 0.0
        %544 = vmatpush1.msra.mxu0 0.0
        %545 = vmatprep.subr.mxu0 0.0
        %546 = vmatpush1.msra.mxu0 0.0
        %547 = vmatprep.subr.mxu0 0.0
        %548 = vmatpush1.msra.mxu0 0.0
        %549 = vmatprep.subr.mxu0 0.0
        %550 = vmatpush1.msra.mxu0 0.0
        %551 = vmatprep.subr.mxu0 0.0
        %552 = vmatpush1.msra.mxu0 0.0
        %553 = vmatprep.subr.mxu0 0.0
        %554 = vmatpush1.msra.mxu0 0.0
        %555 = vmatprep.subr.mxu0 0.0
        %556 = vmatpush1.msra.mxu0 0.0
        %557 = vmatprep.subr.mxu0 0.0
        %558 = vmatpush1.msra.mxu0 0.0
        %559 = vmatprep.subr.mxu0 0.0
        %560 = vmatpush1.msra.mxu0 0.0
        %561 = vmatprep.subr.mxu0 0.0
        %562 = vmatpush1.msra.mxu0 0.0
        %563 = vmatprep.subr.mxu0 0.0
        %564 = vmatpush1.msra.mxu0 0.0
        %565 = vmatprep.subr.mxu0 0.0
        %566 = vmatpush1.msra.mxu0 %v533
        %567 = vmatprep.subr.mxu0 0.0
        %568 = vmatpush1.msra.mxu0 %v532
        %569 = vmatprep.subr.mxu0 0.0
        %570 = vmatpush1.msra.mxu0 %v531
        %571 = vmatprep.subr.mxu0 0.0
        %572 = vmatpush1.msra.mxu0 %v530
        %573 = vmatprep.subr.mxu0 0.0
        %574 = vmatpush2.msra.mxu0 0.0
        %575 = vmatprep.subr.mxu0 0.0
        %576 = vmatpush2.msra.mxu0 0.0
        %577 = vmatprep.subr.mxu0 0.0
        %578 = vmatpush2.msra.mxu0 0.0
        %579 = vmatprep.subr.mxu0 0.0
        %580 = vmatpush2.msra.mxu0 0.0
        %581 = vmatprep.subr.mxu0 0.0
        %582 = vmatpush2.msra.mxu0 0.0
        %583 = vmatprep.subr.mxu0 0.0
        %584 = vmatpush2.msra.mxu0 0.0
        %585 = vmatprep.subr.mxu0 0.0
        %586 = vmatpush2.msra.mxu0 0.0
        %587 = vmatprep.subr.mxu0 0.0
        %588 = vmatpush2.msra.mxu0 0.0
        %589 = vmatprep.subr.mxu0 0.0
        %590 = vmatpush2.msra.mxu0 0.0
        %591 = vmatprep.subr.mxu0 0.0
        %592 = vmatpush2.msra.mxu0 0.0
        %593 = vmatprep.subr.mxu0 0.0
        %594 = vmatpush2.msra.mxu0 0.0
        %595 = vmatprep.subr.mxu0 0.0
        %596 = vmatpush2.msra.mxu0 0.0
        %597 = vmatprep.subr.mxu0 0.0
        %598 = vmatpush2.msra.mxu0 0.0
        %599 = vmatprep.subr.mxu0 0.0
        %600 = vmatpush2.msra.mxu0 0.0
        %601 = vmatprep.subr.mxu0 0.0
        %602 = vmatpush2.msra.mxu0 0.0
        %603 = vmatprep.subr.mxu0 0.0
        %604 = vmatpush2.msra.mxu0 0.0
        %605 = vmatprep.mubr.f32.mxu0 0.0
        %606 = vmatmul.mubr.f32.gmra.mxu0 %v458
        %v607 = vpop.f32.mrf.mxu0
        %v608 = vadd.f32 %v539, %v607
        %v609 = vpop.f32.mrf.mxu0
        %610 = vdwg.mxu0
        %v611 = vld [vmem:[#allocation8] sm:$0xff]
        %v612 = vld [vmem:[#allocation8 + $0x8] sm:$0xff]
        %v613 = vld [vmem:[#allocation8 + $0x10] sm:$0xff]
        %v614 = vld [vmem:[#allocation8 + $0x18] sm:$0xff]
        %v615 = vld [vmem:[%s6] sm:$0x1]
        %v617 = vlaneseq
        %v618 = vshrl.u32 %v617, 7
        %v619 = vsub.s32 0, %v618
        %v620 = vrot.slane %v615, %v619
        %622 = vmatprep.subr.mxu0 0.0
        %623 = vmatpush1.msra.mxu0 0.0
        %624 = vmatprep.subr.mxu0 0.0
        %625 = vmatpush1.msra.mxu0 0.0
        %626 = vmatprep.subr.mxu0 0.0
        %627 = vmatpush1.msra.mxu0 0.0
        %628 = vmatprep.subr.mxu0 0.0
        %629 = vmatpush1.msra.mxu0 0.0
        %630 = vmatprep.subr.mxu0 0.0
        %631 = vmatpush1.msra.mxu0 0.0
        %632 = vmatprep.subr.mxu0 0.0
        %633 = vmatpush1.msra.mxu0 0.0
        %634 = vmatprep.subr.mxu0 0.0
        %635 = vmatpush1.msra.mxu0 0.0
        %636 = vmatprep.subr.mxu0 0.0
        %637 = vmatpush1.msra.mxu0 0.0
        %638 = vmatprep.subr.mxu0 0.0
        %639 = vmatpush1.msra.mxu0 0.0
        %640 = vmatprep.subr.mxu0 0.0
        %641 = vmatpush1.msra.mxu0 0.0
        %642 = vmatprep.subr.mxu0 0.0
        %643 = vmatpush1.msra.mxu0 0.0
        %644 = vmatprep.subr.mxu0 0.0
        %645 = vmatpush1.msra.mxu0 0.0
        %646 = vmatprep.subr.mxu0 0.0
        %647 = vmatpush1.msra.mxu0 %v614
        %648 = vmatprep.subr.mxu0 0.0
        %649 = vmatpush1.msra.mxu0 %v613
        %650 = vmatprep.subr.mxu0 0.0
        %651 = vmatpush1.msra.mxu0 %v612
        %652 = vmatprep.subr.mxu0 0.0
        %653 = vmatpush1.msra.mxu0 %v611
        %654 = vmatprep.subr.mxu0 0.0
        %655 = vmatpush2.msra.mxu0 0.0
        %656 = vmatprep.subr.mxu0 0.0
        %657 = vmatpush2.msra.mxu0 0.0
        %658 = vmatprep.subr.mxu0 0.0
        %659 = vmatpush2.msra.mxu0 0.0
        %660 = vmatprep.subr.mxu0 0.0
        %661 = vmatpush2.msra.mxu0 0.0
        %662 = vmatprep.subr.mxu0 0.0
        %663 = vmatpush2.msra.mxu0 0.0
        %664 = vmatprep.subr.mxu0 0.0
        %665 = vmatpush2.msra.mxu0 0.0
        %666 = vmatprep.subr.mxu0 0.0
        %667 = vmatpush2.msra.mxu0 0.0
        %668 = vmatprep.subr.mxu0 0.0
        %669 = vmatpush2.msra.mxu0 0.0
        %670 = vmatprep.subr.mxu0 0.0
        %671 = vmatpush2.msra.mxu0 0.0
        %672 = vmatprep.subr.mxu0 0.0
        %673 = vmatpush2.msra.mxu0 0.0
        %674 = vmatprep.subr.mxu0 0.0
        %675 = vmatpush2.msra.mxu0 0.0
        %676 = vmatprep.subr.mxu0 0.0
        %677 = vmatpush2.msra.mxu0 0.0
        %678 = vmatprep.subr.mxu0 0.0
        %679 = vmatpush2.msra.mxu0 0.0
        %680 = vmatprep.subr.mxu0 0.0
        %681 = vmatpush2.msra.mxu0 0.0
        %682 = vmatprep.subr.mxu0 0.0
        %683 = vmatpush2.msra.mxu0 0.0
        %684 = vmatprep.subr.mxu0 0.0
        %685 = vmatpush2.msra.mxu0 0.0
        %686 = vmatprep.mubr.f32.mxu0 0.0
        %687 = vmatmul.mubr.f32.gmra.mxu0 %v458
        %v688 = vpop.f32.mrf.mxu0
        %v689 = vadd.f32 %v620, %v688
        %v690 = vpop.f32.mrf.mxu0
        %691 = vdwg.mxu0
        %vm692 = vcmask 64512
        %v694 = vsel %vm692, %v527, 0
        %v697 = vsel %vm692, %v608, 0
        %699 = vmatprep.subr.mxu0 0.0
        %700 = vmatpush1.xpose.msra.mxu0 0.0
        %701 = vmatprep.subr.mxu0 0.0
        %702 = vmatpush1.xpose.msra.mxu0 0.0
        %703 = vmatprep.subr.mxu0 0.0
        %704 = vmatpush1.xpose.msra.mxu0 0.0
        %705 = vmatprep.subr.mxu0 0.0
        %706 = vmatpush1.xpose.msra.mxu0 0.0
        %707 = vmatprep.subr.mxu0 0.0
        %708 = vmatpush1.xpose.msra.mxu0 0.0
        %709 = vmatprep.subr.mxu0 0.0
        %710 = vmatpush1.xpose.msra.mxu0 0.0
        %711 = vmatprep.subr.mxu0 0.0
        %712 = vmatpush1.xpose.msra.mxu0 0.0
        %713 = vmatprep.subr.mxu0 0.0
        %714 = vmatpush1.xpose.msra.mxu0 0.0
        %715 = vmatprep.subr.mxu0 0.0
        %716 = vmatpush1.xpose.msra.mxu0 0.0
        %717 = vmatprep.subr.mxu0 0.0
        %718 = vmatpush1.xpose.msra.mxu0 0.0
        %719 = vmatprep.subr.mxu0 0.0
        %720 = vmatpush1.xpose.msra.mxu0 0.0
        %721 = vmatprep.subr.mxu0 0.0
        %722 = vmatpush1.xpose.msra.mxu0 0.0
        %723 = vmatprep.subr.mxu0 0.0
        %724 = vmatpush1.xpose.msra.mxu0 0.0
        %725 = vmatprep.subr.mxu0 0.0
        %726 = vmatpush1.xpose.msra.mxu0 0.0
        %727 = vmatprep.subr.mxu0 0.0
        %728 = vmatpush1.xpose.msra.mxu0 0.0
        %729 = vmatprep.subr.mxu0 0.0
        %730 = vmatpush1.xpose.msra.mxu0 %v697
        %731 = vmatprep.subr.mxu0 0.0
        %732 = vmatpush2.xpose.msra.mxu0 0.0
        %733 = vmatprep.subr.mxu0 0.0
        %734 = vmatpush2.xpose.msra.mxu0 0.0
        %735 = vmatprep.subr.mxu0 0.0
        %736 = vmatpush2.xpose.msra.mxu0 0.0
        %737 = vmatprep.subr.mxu0 0.0
        %738 = vmatpush2.xpose.msra.mxu0 0.0
        %739 = vmatprep.subr.mxu0 0.0
        %740 = vmatpush2.xpose.msra.mxu0 0.0
        %741 = vmatprep.subr.mxu0 0.0
        %742 = vmatpush2.xpose.msra.mxu0 0.0
        %743 = vmatprep.subr.mxu0 0.0
        %744 = vmatpush2.xpose.msra.mxu0 0.0
        %745 = vmatprep.subr.mxu0 0.0
        %746 = vmatpush2.xpose.msra.mxu0 0.0
        %747 = vmatprep.subr.mxu0 0.0
        %748 = vmatpush2.xpose.msra.mxu0 0.0
        %749 = vmatprep.subr.mxu0 0.0
        %750 = vmatpush2.xpose.msra.mxu0 0.0
        %751 = vmatprep.subr.mxu0 0.0
        %752 = vmatpush2.xpose.msra.mxu0 0.0
        %753 = vmatprep.subr.mxu0 0.0
        %754 = vmatpush2.xpose.msra.mxu0 0.0
        %755 = vmatprep.subr.mxu0 0.0
        %756 = vmatpush2.xpose.msra.mxu0 0.0
        %757 = vmatprep.subr.mxu0 0.0
        %758 = vmatpush2.xpose.msra.mxu0 0.0
        %759 = vmatprep.subr.mxu0 0.0
        %760 = vmatpush2.xpose.msra.mxu0 0.0
        %761 = vmatprep.subr.mxu0 0.0
        %762 = vmatpush2.xpose.msra.mxu0 0.0
        %763 = vmatprep.mubr.f32.mxu0 0.0
        %764 = vmatmul.mubr.f32.gmra.mxu0 %v694
        %v765 = vpop.f32.mrf.mxu0
        %v766 = vadd.f32 0.0, %v765
        %v767 = vpop.f32.mrf.mxu0
        %768 = vdwg.mxu0
        %v769 = vmul.f32 %v766, 0.35355338
        %v770 = vsel %vm692, %v769, -inf
        %771 = vmax.xlane.f32.xlu0 %v770
        %v772 = vpop.xlane.xlu0 %771
        %v773 = vsub.f32 %v769, %v772
        %v774 = vmul.f32 %v773, 1.442695
        %v775 = vpow.pop %v774
        %v776 = vsel %vm692, %v775, 0.0
        %777 = vadd.xlane.f32.xlu0 %v776
        %v778 = vpop.xlane.xlu0 %777
        %v779 = vrcp.pop %v778
        %v780 = vmul.f32 %v775, %v779
        %v781 = vadd.f32 %v780, 0.0
        %v783 = vsel %vm692, %v780, 0
        %785 = vmatprep.subr.mxu0 0.0
        %786 = vmatpush1.msra.mxu0 0.0
        %787 = vmatprep.subr.mxu0 0.0
        %788 = vmatpush1.msra.mxu0 0.0
        %789 = vmatprep.subr.mxu0 0.0
        %790 = vmatpush1.msra.mxu0 0.0
        %791 = vmatprep.subr.mxu0 0.0
        %792 = vmatpush1.msra.mxu0 0.0
        %793 = vmatprep.subr.mxu0 0.0
        %794 = vmatpush1.msra.mxu0 0.0
        %795 = vmatprep.subr.mxu0 0.0
        %796 = vmatpush1.msra.mxu0 0.0
        %797 = vmatprep.subr.mxu0 0.0
        %798 = vmatpush1.msra.mxu0 0.0
        %799 = vmatprep.subr.mxu0 0.0
        %800 = vmatpush1.msra.mxu0 0.0
        %801 = vmatprep.subr.mxu0 0.0
        %802 = vmatpush1.msra.mxu0 0.0
        %803 = vmatprep.subr.mxu0 0.0
        %804 = vmatpush1.msra.mxu0 0.0
        %805 = vmatprep.subr.mxu0 0.0
        %806 = vmatpush1.msra.mxu0 0.0
        %807 = vmatprep.subr.mxu0 0.0
        %808 = vmatpush1.msra.mxu0 0.0
        %809 = vmatprep.subr.mxu0 0.0
        %810 = vmatpush1.msra.mxu0 0.0
        %811 = vmatprep.subr.mxu0 0.0
        %812 = vmatpush1.msra.mxu0 0.0
        %813 = vmatprep.subr.mxu0 0.0
        %814 = vmatpush1.msra.mxu0 0.0
        %815 = vmatprep.subr.mxu0 0.0
        %816 = vmatpush1.msra.mxu0 %v689
        %817 = vmatprep.subr.mxu0 0.0
        %818 = vmatpush2.msra.mxu0 0.0
        %819 = vmatprep.subr.mxu0 0.0
        %820 = vmatpush2.msra.mxu0 0.0
        %821 = vmatprep.subr.mxu0 0.0
        %822 = vmatpush2.msra.mxu0 0.0
        %823 = vmatprep.subr.mxu0 0.0
        %824 = vmatpush2.msra.mxu0 0.0
        %825 = vmatprep.subr.mxu0 0.0
        %826 = vmatpush2.msra.mxu0 0.0
        %827 = vmatprep.subr.mxu0 0.0
        %828 = vmatpush2.msra.mxu0 0.0
        %829 = vmatprep.subr.mxu0 0.0
        %830 = vmatpush2.msra.mxu0 0.0
        %831 = vmatprep.subr.mxu0 0.0
        %832 = vmatpush2.msra.mxu0 0.0
        %833 = vmatprep.subr.mxu0 0.0
        %834 = vmatpush2.msra.mxu0 0.0
        %835 = vmatprep.subr.mxu0 0.0
        %836 = vmatpush2.msra.mxu0 0.0
        %837 = vmatprep.subr.mxu0 0.0
        %838 = vmatpush2.msra.mxu0 0.0
        %839 = vmatprep.subr.mxu0 0.0
        %840 = vmatpush2.msra.mxu0 0.0
        %841 = vmatprep.subr.mxu0 0.0
        %842 = vmatpush2.msra.mxu0 0.0
        %843 = vmatprep.subr.mxu0 0.0
        %844 = vmatpush2.msra.mxu0 0.0
        %845 = vmatprep.subr.mxu0 0.0
        %846 = vmatpush2.msra.mxu0 0.0
        %847 = vmatprep.subr.mxu0 0.0
        %848 = vmatpush2.msra.mxu0 0.0
        %849 = vmatprep.mubr.f32.mxu0 0.0
        %850 = vmatmul.mubr.f32.gmra.mxu0 %v783
        %v851 = vpop.f32.mrf.mxu0
        %v852 = vadd.f32 0.0, %v851
        %v853 = vpop.f32.mrf.mxu0
        %854 = vdwg.mxu0
        %v855 = vld [vmem:[#allocation10] sm:$0xff]
        %856 = vrot.lane.b32.xlu0 %v527, 120
        %v857 = vpop.permute.xlu0 %856
        %858 = vrot.lane.b32.xlu0 %v608, 120
        %v859 = vpop.permute.xlu0 %858
        %v860 = vsel %vm692, %v857, 0
        %v862 = vsel %vm692, %v859, 0
        %864 = vmatprep.subr.mxu0 0.0
        %865 = vmatpush1.xpose.msra.mxu0 0.0
        %866 = vmatprep.subr.mxu0 0.0
        %867 = vmatpush1.xpose.msra.mxu0 0.0
        %868 = vmatprep.subr.mxu0 0.0
        %869 = vmatpush1.xpose.msra.mxu0 0.0
        %870 = vmatprep.subr.mxu0 0.0
        %871 = vmatpush1.xpose.msra.mxu0 0.0
        %872 = vmatprep.subr.mxu0 0.0
        %873 = vmatpush1.xpose.msra.mxu0 0.0
        %874 = vmatprep.subr.mxu0 0.0
        %875 = vmatpush1.xpose.msra.mxu0 0.0
        %876 = vmatprep.subr.mxu0 0.0
        %877 = vmatpush1.xpose.msra.mxu0 0.0
        %878 = vmatprep.subr.mxu0 0.0
        %879 = vmatpush1.xpose.msra.mxu0 0.0
        %880 = vmatprep.subr.mxu0 0.0
        %881 = vmatpush1.xpose.msra.mxu0 0.0
        %882 = vmatprep.subr.mxu0 0.0
        %883 = vmatpush1.xpose.msra.mxu0 0.0
        %884 = vmatprep.subr.mxu0 0.0
        %885 = vmatpush1.xpose.msra.mxu0 0.0
        %886 = vmatprep.subr.mxu0 0.0
        %887 = vmatpush1.xpose.msra.mxu0 0.0
        %888 = vmatprep.subr.mxu0 0.0
        %889 = vmatpush1.xpose.msra.mxu0 0.0
        %890 = vmatprep.subr.mxu0 0.0
        %891 = vmatpush1.xpose.msra.mxu0 0.0
        %892 = vmatprep.subr.mxu0 0.0
        %893 = vmatpush1.xpose.msra.mxu0 0.0
        %894 = vmatprep.subr.mxu0 0.0
        %895 = vmatpush1.xpose.msra.mxu0 %v862
        %896 = vmatprep.subr.mxu0 0.0
        %897 = vmatpush2.xpose.msra.mxu0 0.0
        %898 = vmatprep.subr.mxu0 0.0
        %899 = vmatpush2.xpose.msra.mxu0 0.0
        %900 = vmatprep.subr.mxu0 0.0
        %901 = vmatpush2.xpose.msra.mxu0 0.0
        %902 = vmatprep.subr.mxu0 0.0
        %903 = vmatpush2.xpose.msra.mxu0 0.0
        %904 = vmatprep.subr.mxu0 0.0
        %905 = vmatpush2.xpose.msra.mxu0 0.0
        %906 = vmatprep.subr.mxu0 0.0
        %907 = vmatpush2.xpose.msra.mxu0 0.0
        %908 = vmatprep.subr.mxu0 0.0
        %909 = vmatpush2.xpose.msra.mxu0 0.0
        %910 = vmatprep.subr.mxu0 0.0
        %911 = vmatpush2.xpose.msra.mxu0 0.0
        %912 = vmatprep.subr.mxu0 0.0
        %913 = vmatpush2.xpose.msra.mxu0 0.0
        %914 = vmatprep.subr.mxu0 0.0
        %915 = vmatpush2.xpose.msra.mxu0 0.0
        %916 = vmatprep.subr.mxu0 0.0
        %917 = vmatpush2.xpose.msra.mxu0 0.0
        %918 = vmatprep.subr.mxu0 0.0
        %919 = vmatpush2.xpose.msra.mxu0 0.0
        %920 = vmatprep.subr.mxu0 0.0
        %921 = vmatpush2.xpose.msra.mxu0 0.0
        %922 = vmatprep.subr.mxu0 0.0
        %923 = vmatpush2.xpose.msra.mxu0 0.0
        %924 = vmatprep.subr.mxu0 0.0
        %925 = vmatpush2.xpose.msra.mxu0 0.0
        %926 = vmatprep.subr.mxu0 0.0
        %927 = vmatpush2.xpose.msra.mxu0 0.0
        %928 = vmatprep.mubr.f32.mxu0 0.0
        %929 = vmatmul.mubr.f32.gmra.mxu0 %v860
        %v930 = vpop.f32.mrf.mxu0
        %v931 = vadd.f32 0.0, %v930
        %v932 = vpop.f32.mrf.mxu0
        %933 = vdwg.mxu0
        %v934 = vmul.f32 %v931, 0.35355338
        %v935 = vsel %vm692, %v934, -inf
        %936 = vmax.xlane.f32.xlu0 %v935
        %v937 = vpop.xlane.xlu0 %936
        %v938 = vsub.f32 %v934, %v937
        %v939 = vmul.f32 %v938, 1.442695
        %v940 = vpow.pop %v939
        %v941 = vsel %vm692, %v940, 0.0
        %942 = vadd.xlane.f32.xlu0 %v941
        %v943 = vpop.xlane.xlu0 %942
        %v944 = vrcp.pop %v943
        %v945 = vmul.f32 %v940, %v944
        %v946 = vadd.f32 %v781, %v945
        %948 = vrot.lane.b32.xlu0 %v689, 120
        %v949 = vpop.permute.xlu0 %948
        %v952 = vsel %vm692, %v945, 0
        %954 = vmatprep.subr.mxu0 0.0
        %955 = vmatpush1.msra.mxu0 0.0
        %956 = vmatprep.subr.mxu0 0.0
        %957 = vmatpush1.msra.mxu0 0.0
        %958 = vmatprep.subr.mxu0 0.0
        %959 = vmatpush1.msra.mxu0 0.0
        %960 = vmatprep.subr.mxu0 0.0
        %961 = vmatpush1.msra.mxu0 0.0
        %962 = vmatprep.subr.mxu0 0.0
        %963 = vmatpush1.msra.mxu0 0.0
        %964 = vmatprep.subr.mxu0 0.0
        %965 = vmatpush1.msra.mxu0 0.0
        %966 = vmatprep.subr.mxu0 0.0
        %967 = vmatpush1.msra.mxu0 0.0
        %968 = vmatprep.subr.mxu0 0.0
        %969 = vmatpush1.msra.mxu0 0.0
        %970 = vmatprep.subr.mxu0 0.0
        %971 = vmatpush1.msra.mxu0 0.0
        %972 = vmatprep.subr.mxu0 0.0
        %973 = vmatpush1.msra.mxu0 0.0
        %974 = vmatprep.subr.mxu0 0.0
        %975 = vmatpush1.msra.mxu0 0.0
        %976 = vmatprep.subr.mxu0 0.0
        %977 = vmatpush1.msra.mxu0 0.0
        %978 = vmatprep.subr.mxu0 0.0
        %979 = vmatpush1.msra.mxu0 0.0
        %980 = vmatprep.subr.mxu0 0.0
        %981 = vmatpush1.msra.mxu0 0.0
        %982 = vmatprep.subr.mxu0 0.0
        %983 = vmatpush1.msra.mxu0 0.0
        %984 = vmatprep.subr.mxu0 0.0
        %985 = vmatpush1.msra.mxu0 %v949
        %986 = vmatprep.subr.mxu0 0.0
        %987 = vmatpush2.msra.mxu0 0.0
        %988 = vmatprep.subr.mxu0 0.0
        %989 = vmatpush2.msra.mxu0 0.0
        %990 = vmatprep.subr.mxu0 0.0
        %991 = vmatpush2.msra.mxu0 0.0
        %992 = vmatprep.subr.mxu0 0.0
        %993 = vmatpush2.msra.mxu0 0.0
        %994 = vmatprep.subr.mxu0 0.0
        %995 = vmatpush2.msra.mxu0 0.0
        %996 = vmatprep.subr.mxu0 0.0
        %997 = vmatpush2.msra.mxu0 0.0
        %998 = vmatprep.subr.mxu0 0.0
        %999 = vmatpush2.msra.mxu0 0.0
        %1000 = vmatprep.subr.mxu0 0.0
        %1001 = vmatpush2.msra.mxu0 0.0
        %1002 = vmatprep.subr.mxu0 0.0
        %1003 = vmatpush2.msra.mxu0 0.0
        %1004 = vmatprep.subr.mxu0 0.0
        %1005 = vmatpush2.msra.mxu0 0.0
        %1006 = vmatprep.subr.mxu0 0.0
        %1007 = vmatpush2.msra.mxu0 0.0
        %1008 = vmatprep.subr.mxu0 0.0
        %1009 = vmatpush2.msra.mxu0 0.0
        %1010 = vmatprep.subr.mxu0 0.0
        %1011 = vmatpush2.msra.mxu0 0.0
        %1012 = vmatprep.subr.mxu0 0.0
        %1013 = vmatpush2.msra.mxu0 0.0
        %1014 = vmatprep.subr.mxu0 0.0
        %1015 = vmatpush2.msra.mxu0 0.0
        %1016 = vmatprep.subr.mxu0 0.0
        %1017 = vmatpush2.msra.mxu0 0.0
        %1018 = vmatprep.mubr.f32.mxu0 0.0
        %1019 = vmatmul.mubr.f32.gmra.mxu0 %v952
        %v1020 = vpop.f32.mrf.mxu0
        %v1021 = vadd.f32 0.0, %v1020
        %v1022 = vpop.f32.mrf.mxu0
        %1023 = vdwg.mxu0
        %v1024 = vld [vmem:[#allocation10 + $0x8] sm:$0xff]
        %v1026 = vsel %vm692, %v1021, 0
        %1028 = vmatprep.subr.mxu0 0.0
        %1029 = vmatpush1.msra.mxu0 0.0
        %1030 = vmatprep.subr.mxu0 0.0
        %1031 = vmatpush1.msra.mxu0 0.0
        %1032 = vmatprep.subr.mxu0 0.0
        %1033 = vmatpush1.msra.mxu0 0.0
        %1034 = vmatprep.subr.mxu0 0.0
        %1035 = vmatpush1.msra.mxu0 0.0
        %1036 = vmatprep.subr.mxu0 0.0
        %1037 = vmatpush1.msra.mxu0 0.0
        %1038 = vmatprep.subr.mxu0 0.0
        %1039 = vmatpush1.msra.mxu0 0.0
        %1040 = vmatprep.subr.mxu0 0.0
        %1041 = vmatpush1.msra.mxu0 0.0
        %1042 = vmatprep.subr.mxu0 0.0
        %1043 = vmatpush1.msra.mxu0 0.0
        %1044 = vmatprep.subr.mxu0 0.0
        %1045 = vmatpush1.msra.mxu0 0.0
        %1046 = vmatprep.subr.mxu0 0.0
        %1047 = vmatpush1.msra.mxu0 0.0
        %1048 = vmatprep.subr.mxu0 0.0
        %1049 = vmatpush1.msra.mxu0 0.0
        %1050 = vmatprep.subr.mxu0 0.0
        %1051 = vmatpush1.msra.mxu0 0.0
        %1052 = vmatprep.subr.mxu0 0.0
        %1053 = vmatpush1.msra.mxu0 0.0
        %1054 = vmatprep.subr.mxu0 0.0
        %1055 = vmatpush1.msra.mxu0 0.0
        %1056 = vmatprep.subr.mxu0 0.0
        %1057 = vmatpush1.msra.mxu0 0.0
        %1058 = vmatprep.subr.mxu0 0.0
        %1059 = vmatpush1.msra.mxu0 %v1024
        %1060 = vmatprep.subr.mxu0 0.0
        %1061 = vmatpush2.msra.mxu0 0.0
        %1062 = vmatprep.subr.mxu0 0.0
        %1063 = vmatpush2.msra.mxu0 0.0
        %1064 = vmatprep.subr.mxu0 0.0
        %1065 = vmatpush2.msra.mxu0 0.0
        %1066 = vmatprep.subr.mxu0 0.0
        %1067 = vmatpush2.msra.mxu0 0.0
        %1068 = vmatprep.subr.mxu0 0.0
        %1069 = vmatpush2.msra.mxu0 0.0
        %1070 = vmatprep.subr.mxu0 0.0
        %1071 = vmatpush2.msra.mxu0 0.0
        %1072 = vmatprep.subr.mxu0 0.0
        %1073 = vmatpush2.msra.mxu0 0.0
        %1074 = vmatprep.subr.mxu0 0.0
        %1075 = vmatpush2.msra.mxu0 0.0
        %1076 = vmatprep.subr.mxu0 0.0
        %1077 = vmatpush2.msra.mxu0 0.0
        %1078 = vmatprep.subr.mxu0 0.0
        %1079 = vmatpush2.msra.mxu0 0.0
        %1080 = vmatprep.subr.mxu0 0.0
        %1081 = vmatpush2.msra.mxu0 0.0
        %1082 = vmatprep.subr.mxu0 0.0
        %1083 = vmatpush2.msra.mxu0 0.0
        %1084 = vmatprep.subr.mxu0 0.0
        %1085 = vmatpush2.msra.mxu0 0.0
        %1086 = vmatprep.subr.mxu0 0.0
        %1087 = vmatpush2.msra.mxu0 0.0
        %1088 = vmatprep.subr.mxu0 0.0
        %1089 = vmatpush2.msra.mxu0 0.0
        %1090 = vmatprep.subr.mxu0 0.0
        %1091 = vmatpush2.msra.mxu0 0.0
        %1092 = vmatprep.mubr.f32.mxu0 0.0
        %1093 = vmatmul.mubr.f32.gmra.mxu0 %v1026
        %v1094 = vpop.f32.mrf.mxu0
        %v1095 = vadd.f32 0.0, %v1094
        %v1096 = vpop.f32.mrf.mxu0
        %1097 = vdwg.mxu0
        %v1099 = vsel %vm692, %v852, 0
        %1101 = vmatprep.subr.mxu0 0.0
        %1102 = vmatpush1.msra.mxu0 0.0
        %1103 = vmatprep.subr.mxu0 0.0
        %1104 = vmatpush1.msra.mxu0 0.0
        %1105 = vmatprep.subr.mxu0 0.0
        %1106 = vmatpush1.msra.mxu0 0.0
        %1107 = vmatprep.subr.mxu0 0.0
        %1108 = vmatpush1.msra.mxu0 0.0
        %1109 = vmatprep.subr.mxu0 0.0
        %1110 = vmatpush1.msra.mxu0 0.0
        %1111 = vmatprep.subr.mxu0 0.0
        %1112 = vmatpush1.msra.mxu0 0.0
        %1113 = vmatprep.subr.mxu0 0.0
        %1114 = vmatpush1.msra.mxu0 0.0
        %1115 = vmatprep.subr.mxu0 0.0
        %1116 = vmatpush1.msra.mxu0 0.0
        %1117 = vmatprep.subr.mxu0 0.0
        %1118 = vmatpush1.msra.mxu0 0.0
        %1119 = vmatprep.subr.mxu0 0.0
        %1120 = vmatpush1.msra.mxu0 0.0
        %1121 = vmatprep.subr.mxu0 0.0
        %1122 = vmatpush1.msra.mxu0 0.0
        %1123 = vmatprep.subr.mxu0 0.0
        %1124 = vmatpush1.msra.mxu0 0.0
        %1125 = vmatprep.subr.mxu0 0.0
        %1126 = vmatpush1.msra.mxu0 0.0
        %1127 = vmatprep.subr.mxu0 0.0
        %1128 = vmatpush1.msra.mxu0 0.0
        %1129 = vmatprep.subr.mxu0 0.0
        %1130 = vmatpush1.msra.mxu0 0.0
        %1131 = vmatprep.subr.mxu0 0.0
        %1132 = vmatpush1.msra.mxu0 %v855
        %1133 = vmatprep.subr.mxu0 0.0
        %1134 = vmatpush2.msra.mxu0 0.0
        %1135 = vmatprep.subr.mxu0 0.0
        %1136 = vmatpush2.msra.mxu0 0.0
        %1137 = vmatprep.subr.mxu0 0.0
        %1138 = vmatpush2.msra.mxu0 0.0
        %1139 = vmatprep.subr.mxu0 0.0
        %1140 = vmatpush2.msra.mxu0 0.0
        %1141 = vmatprep.subr.mxu0 0.0
        %1142 = vmatpush2.msra.mxu0 0.0
        %1143 = vmatprep.subr.mxu0 0.0
        %1144 = vmatpush2.msra.mxu0 0.0
        %1145 = vmatprep.subr.mxu0 0.0
        %1146 = vmatpush2.msra.mxu0 0.0
        %1147 = vmatprep.subr.mxu0 0.0
        %1148 = vmatpush2.msra.mxu0 0.0
        %1149 = vmatprep.subr.mxu0 0.0
        %1150 = vmatpush2.msra.mxu0 0.0
        %1151 = vmatprep.subr.mxu0 0.0
        %1152 = vmatpush2.msra.mxu0 0.0
        %1153 = vmatprep.subr.mxu0 0.0
        %1154 = vmatpush2.msra.mxu0 0.0
        %1155 = vmatprep.subr.mxu0 0.0
        %1156 = vmatpush2.msra.mxu0 0.0
        %1157 = vmatprep.subr.mxu0 0.0
        %1158 = vmatpush2.msra.mxu0 0.0
        %1159 = vmatprep.subr.mxu0 0.0
        %1160 = vmatpush2.msra.mxu0 0.0
        %1161 = vmatprep.subr.mxu0 0.0
        %1162 = vmatpush2.msra.mxu0 0.0
        %1163 = vmatprep.subr.mxu0 0.0
        %1164 = vmatpush2.msra.mxu0 0.0
        %1165 = vmatprep.mubr.f32.mxu0 0.0
        %1166 = vmatmul.mubr.f32.gmra.mxu0 %v1099
        %v1167 = vpop.f32.mrf.mxu0
        %v1168 = vadd.f32 %v1095, %v1167
        %v1169 = vpop.f32.mrf.mxu0
        %1170 = vdwg.mxu0
        %1171 = vrot.lane.b32.xlu0 %v527, 112
        %v1172 = vpop.permute.xlu0 %1171
        %1173 = vrot.lane.b32.xlu0 %v608, 112
        %v1174 = vpop.permute.xlu0 %1173
        %v1175 = vsel %vm692, %v1172, 0
        %v1177 = vsel %vm692, %v1174, 0
        %1179 = vmatprep.subr.mxu0 0.0
        %1180 = vmatpush1.xpose.msra.mxu0 0.0
        %1181 = vmatprep.subr.mxu0 0.0
        %1182 = vmatpush1.xpose.msra.mxu0 0.0
        %1183 = vmatprep.subr.mxu0 0.0
        %1184 = vmatpush1.xpose.msra.mxu0 0.0
        %1185 = vmatprep.subr.mxu0 0.0
        %1186 = vmatpush1.xpose.msra.mxu0 0.0
        %1187 = vmatprep.subr.mxu0 0.0
        %1188 = vmatpush1.xpose.msra.mxu0 0.0
        %1189 = vmatprep.subr.mxu0 0.0
        %1190 = vmatpush1.xpose.msra.mxu0 0.0
        %1191 = vmatprep.subr.mxu0 0.0
        %1192 = vmatpush1.xpose.msra.mxu0 0.0
        %1193 = vmatprep.subr.mxu0 0.0
        %1194 = vmatpush1.xpose.msra.mxu0 0.0
        %1195 = vmatprep.subr.mxu0 0.0
        %1196 = vmatpush1.xpose.msra.mxu0 0.0
        %1197 = vmatprep.subr.mxu0 0.0
        %1198 = vmatpush1.xpose.msra.mxu0 0.0
        %1199 = vmatprep.subr.mxu0 0.0
        %1200 = vmatpush1.xpose.msra.mxu0 0.0
        %1201 = vmatprep.subr.mxu0 0.0
        %1202 = vmatpush1.xpose.msra.mxu0 0.0
        %1203 = vmatprep.subr.mxu0 0.0
        %1204 = vmatpush1.xpose.msra.mxu0 0.0
        %1205 = vmatprep.subr.mxu0 0.0
        %1206 = vmatpush1.xpose.msra.mxu0 0.0
        %1207 = vmatprep.subr.mxu0 0.0
        %1208 = vmatpush1.xpose.msra.mxu0 0.0
        %1209 = vmatprep.subr.mxu0 0.0
        %1210 = vmatpush1.xpose.msra.mxu0 %v1177
        %1211 = vmatprep.subr.mxu0 0.0
        %1212 = vmatpush2.xpose.msra.mxu0 0.0
        %1213 = vmatprep.subr.mxu0 0.0
        %1214 = vmatpush2.xpose.msra.mxu0 0.0
        %1215 = vmatprep.subr.mxu0 0.0
        %1216 = vmatpush2.xpose.msra.mxu0 0.0
        %1217 = vmatprep.subr.mxu0 0.0
        %1218 = vmatpush2.xpose.msra.mxu0 0.0
        %1219 = vmatprep.subr.mxu0 0.0
        %1220 = vmatpush2.xpose.msra.mxu0 0.0
        %1221 = vmatprep.subr.mxu0 0.0
        %1222 = vmatpush2.xpose.msra.mxu0 0.0
        %1223 = vmatprep.subr.mxu0 0.0
        %1224 = vmatpush2.xpose.msra.mxu0 0.0
        %1225 = vmatprep.subr.mxu0 0.0
        %1226 = vmatpush2.xpose.msra.mxu0 0.0
        %1227 = vmatprep.subr.mxu0 0.0
        %1228 = vmatpush2.xpose.msra.mxu0 0.0
        %1229 = vmatprep.subr.mxu0 0.0
        %1230 = vmatpush2.xpose.msra.mxu0 0.0
        %1231 = vmatprep.subr.mxu0 0.0
        %1232 = vmatpush2.xpose.msra.mxu0 0.0
        %1233 = vmatprep.subr.mxu0 0.0
        %1234 = vmatpush2.xpose.msra.mxu0 0.0
        %1235 = vmatprep.subr.mxu0 0.0
        %1236 = vmatpush2.xpose.msra.mxu0 0.0
        %1237 = vmatprep.subr.mxu0 0.0
        %1238 = vmatpush2.xpose.msra.mxu0 0.0
        %1239 = vmatprep.subr.mxu0 0.0
        %1240 = vmatpush2.xpose.msra.mxu0 0.0
        %1241 = vmatprep.subr.mxu0 0.0
        %1242 = vmatpush2.xpose.msra.mxu0 0.0
        %1243 = vmatprep.mubr.f32.mxu0 0.0
        %1244 = vmatmul.mubr.f32.gmra.mxu0 %v1175
        %v1245 = vpop.f32.mrf.mxu0
        %v1246 = vadd.f32 0.0, %v1245
        %v1247 = vpop.f32.mrf.mxu0
        %1248 = vdwg.mxu0
        %v1249 = vmul.f32 %v1246, 0.35355338
        %v1250 = vsel %vm692, %v1249, -inf
        %1251 = vmax.xlane.f32.xlu0 %v1250
        %v1252 = vpop.xlane.xlu0 %1251
        %v1253 = vsub.f32 %v1249, %v1252
        %v1254 = vmul.f32 %v1253, 1.442695
        %v1255 = vpow.pop %v1254
        %v1256 = vsel %vm692, %v1255, 0.0
        %1257 = vadd.xlane.f32.xlu0 %v1256
        %v1258 = vpop.xlane.xlu0 %1257
        %v1259 = vrcp.pop %v1258
        %v1260 = vmul.f32 %v1255, %v1259
        %v1261 = vadd.f32 %v946, %v1260
        %1262 = vrot.lane.b32.xlu0 %v689, 112
        %v1263 = vpop.permute.xlu0 %1262
        %v1266 = vsel %vm692, %v1260, 0
        %1268 = vmatprep.subr.mxu0 0.0
        %1269 = vmatpush1.msra.mxu0 0.0
        %1270 = vmatprep.subr.mxu0 0.0
        %1271 = vmatpush1.msra.mxu0 0.0
        %1272 = vmatprep.subr.mxu0 0.0
        %1273 = vmatpush1.msra.mxu0 0.0
        %1274 = vmatprep.subr.mxu0 0.0
        %1275 = vmatpush1.msra.mxu0 0.0
        %1276 = vmatprep.subr.mxu0 0.0
        %1277 = vmatpush1.msra.mxu0 0.0
        %1278 = vmatprep.subr.mxu0 0.0
        %1279 = vmatpush1.msra.mxu0 0.0
        %1280 = vmatprep.subr.mxu0 0.0
        %1281 = vmatpush1.msra.mxu0 0.0
        %1282 = vmatprep.subr.mxu0 0.0
        %1283 = vmatpush1.msra.mxu0 0.0
        %1284 = vmatprep.subr.mxu0 0.0
        %1285 = vmatpush1.msra.mxu0 0.0
        %1286 = vmatprep.subr.mxu0 0.0
        %1287 = vmatpush1.msra.mxu0 0.0
        %1288 = vmatprep.subr.mxu0 0.0
        %1289 = vmatpush1.msra.mxu0 0.0
        %1290 = vmatprep.subr.mxu0 0.0
        %1291 = vmatpush1.msra.mxu0 0.0
        %1292 = vmatprep.subr.mxu0 0.0
        %1293 = vmatpush1.msra.mxu0 0.0
        %1294 = vmatprep.subr.mxu0 0.0
        %1295 = vmatpush1.msra.mxu0 0.0
        %1296 = vmatprep.subr.mxu0 0.0
        %1297 = vmatpush1.msra.mxu0 0.0
        %1298 = vmatprep.subr.mxu0 0.0
        %1299 = vmatpush1.msra.mxu0 %v1263
        %1300 = vmatprep.subr.mxu0 0.0
        %1301 = vmatpush2.msra.mxu0 0.0
        %1302 = vmatprep.subr.mxu0 0.0
        %1303 = vmatpush2.msra.mxu0 0.0
        %1304 = vmatprep.subr.mxu0 0.0
        %1305 = vmatpush2.msra.mxu0 0.0
        %1306 = vmatprep.subr.mxu0 0.0
        %1307 = vmatpush2.msra.mxu0 0.0
        %1308 = vmatprep.subr.mxu0 0.0
        %1309 = vmatpush2.msra.mxu0 0.0
        %1310 = vmatprep.subr.mxu0 0.0
        %1311 = vmatpush2.msra.mxu0 0.0
        %1312 = vmatprep.subr.mxu0 0.0
        %1313 = vmatpush2.msra.mxu0 0.0
        %1314 = vmatprep.subr.mxu0 0.0
        %1315 = vmatpush2.msra.mxu0 0.0
        %1316 = vmatprep.subr.mxu0 0.0
        %1317 = vmatpush2.msra.mxu0 0.0
        %1318 = vmatprep.subr.mxu0 0.0
        %1319 = vmatpush2.msra.mxu0 0.0
        %1320 = vmatprep.subr.mxu0 0.0
        %1321 = vmatpush2.msra.mxu0 0.0
        %1322 = vmatprep.subr.mxu0 0.0
        %1323 = vmatpush2.msra.mxu0 0.0
        %1324 = vmatprep.subr.mxu0 0.0
        %1325 = vmatpush2.msra.mxu0 0.0
        %1326 = vmatprep.subr.mxu0 0.0
        %1327 = vmatpush2.msra.mxu0 0.0
        %1328 = vmatprep.subr.mxu0 0.0
        %1329 = vmatpush2.msra.mxu0 0.0
        %1330 = vmatprep.subr.mxu0 0.0
        %1331 = vmatpush2.msra.mxu0 0.0
        %1332 = vmatprep.mubr.f32.mxu0 0.0
        %1333 = vmatmul.mubr.f32.gmra.mxu0 %v1266
        %v1334 = vpop.f32.mrf.mxu0
        %v1335 = vadd.f32 0.0, %v1334
        %v1336 = vpop.f32.mrf.mxu0
        %1337 = vdwg.mxu0
        %v1338 = vld [vmem:[#allocation10 + $0x10] sm:$0xff]
        %v1340 = vsel %vm692, %v1335, 0
        %1342 = vmatprep.subr.mxu0 0.0
        %1343 = vmatpush1.msra.mxu0 0.0
        %1344 = vmatprep.subr.mxu0 0.0
        %1345 = vmatpush1.msra.mxu0 0.0
        %1346 = vmatprep.subr.mxu0 0.0
        %1347 = vmatpush1.msra.mxu0 0.0
        %1348 = vmatprep.subr.mxu0 0.0
        %1349 = vmatpush1.msra.mxu0 0.0
        %1350 = vmatprep.subr.mxu0 0.0
        %1351 = vmatpush1.msra.mxu0 0.0
        %1352 = vmatprep.subr.mxu0 0.0
        %1353 = vmatpush1.msra.mxu0 0.0
        %1354 = vmatprep.subr.mxu0 0.0
        %1355 = vmatpush1.msra.mxu0 0.0
        %1356 = vmatprep.subr.mxu0 0.0
        %1357 = vmatpush1.msra.mxu0 0.0
        %1358 = vmatprep.subr.mxu0 0.0
        %1359 = vmatpush1.msra.mxu0 0.0
        %1360 = vmatprep.subr.mxu0 0.0
        %1361 = vmatpush1.msra.mxu0 0.0
        %1362 = vmatprep.subr.mxu0 0.0
        %1363 = vmatpush1.msra.mxu0 0.0
        %1364 = vmatprep.subr.mxu0 0.0
        %1365 = vmatpush1.msra.mxu0 0.0
        %1366 = vmatprep.subr.mxu0 0.0
        %1367 = vmatpush1.msra.mxu0 0.0
        %1368 = vmatprep.subr.mxu0 0.0
        %1369 = vmatpush1.msra.mxu0 0.0
        %1370 = vmatprep.subr.mxu0 0.0
        %1371 = vmatpush1.msra.mxu0 0.0
        %1372 = vmatprep.subr.mxu0 0.0
        %1373 = vmatpush1.msra.mxu0 %v1338
        %1374 = vmatprep.subr.mxu0 0.0
        %1375 = vmatpush2.msra.mxu0 0.0
        %1376 = vmatprep.subr.mxu0 0.0
        %1377 = vmatpush2.msra.mxu0 0.0
        %1378 = vmatprep.subr.mxu0 0.0
        %1379 = vmatpush2.msra.mxu0 0.0
        %1380 = vmatprep.subr.mxu0 0.0
        %1381 = vmatpush2.msra.mxu0 0.0
        %1382 = vmatprep.subr.mxu0 0.0
        %1383 = vmatpush2.msra.mxu0 0.0
        %1384 = vmatprep.subr.mxu0 0.0
        %1385 = vmatpush2.msra.mxu0 0.0
        %1386 = vmatprep.subr.mxu0 0.0
        %1387 = vmatpush2.msra.mxu0 0.0
        %1388 = vmatprep.subr.mxu0 0.0
        %1389 = vmatpush2.msra.mxu0 0.0
        %1390 = vmatprep.subr.mxu0 0.0
        %1391 = vmatpush2.msra.mxu0 0.0
        %1392 = vmatprep.subr.mxu0 0.0
        %1393 = vmatpush2.msra.mxu0 0.0
        %1394 = vmatprep.subr.mxu0 0.0
        %1395 = vmatpush2.msra.mxu0 0.0
        %1396 = vmatprep.subr.mxu0 0.0
        %1397 = vmatpush2.msra.mxu0 0.0
        %1398 = vmatprep.subr.mxu0 0.0
        %1399 = vmatpush2.msra.mxu0 0.0
        %1400 = vmatprep.subr.mxu0 0.0
        %1401 = vmatpush2.msra.mxu0 0.0
        %1402 = vmatprep.subr.mxu0 0.0
        %1403 = vmatpush2.msra.mxu0 0.0
        %1404 = vmatprep.subr.mxu0 0.0
        %1405 = vmatpush2.msra.mxu0 0.0
        %1406 = vmatprep.mubr.f32.mxu0 0.0
        %1407 = vmatmul.mubr.f32.gmra.mxu0 %v1340
        %v1408 = vpop.f32.mrf.mxu0
        %v1409 = vadd.f32 0.0, %v1408
        %v1410 = vpop.f32.mrf.mxu0
        %1411 = vdwg.mxu0
        %v1412 = vadd.f32 %v1168, %v1409
        %1413 = vrot.lane.b32.xlu0 %v527, 104
        %v1414 = vpop.permute.xlu0 %1413
        %1415 = vrot.lane.b32.xlu0 %v608, 104
        %v1416 = vpop.permute.xlu0 %1415
        %v1417 = vsel %vm692, %v1414, 0
        %v1419 = vsel %vm692, %v1416, 0
        %1421 = vmatprep.subr.mxu0 0.0
        %1422 = vmatpush1.xpose.msra.mxu0 0.0
        %1423 = vmatprep.subr.mxu0 0.0
        %1424 = vmatpush1.xpose.msra.mxu0 0.0
        %1425 = vmatprep.subr.mxu0 0.0
        %1426 = vmatpush1.xpose.msra.mxu0 0.0
        %1427 = vmatprep.subr.mxu0 0.0
        %1428 = vmatpush1.xpose.msra.mxu0 0.0
        %1429 = vmatprep.subr.mxu0 0.0
        %1430 = vmatpush1.xpose.msra.mxu0 0.0
        %1431 = vmatprep.subr.mxu0 0.0
        %1432 = vmatpush1.xpose.msra.mxu0 0.0
        %1433 = vmatprep.subr.mxu0 0.0
        %1434 = vmatpush1.xpose.msra.mxu0 0.0
        %1435 = vmatprep.subr.mxu0 0.0
        %1436 = vmatpush1.xpose.msra.mxu0 0.0
        %1437 = vmatprep.subr.mxu0 0.0
        %1438 = vmatpush1.xpose.msra.mxu0 0.0
        %1439 = vmatprep.subr.mxu0 0.0
        %1440 = vmatpush1.xpose.msra.mxu0 0.0
        %1441 = vmatprep.subr.mxu0 0.0
        %1442 = vmatpush1.xpose.msra.mxu0 0.0
        %1443 = vmatprep.subr.mxu0 0.0
        %1444 = vmatpush1.xpose.msra.mxu0 0.0
        %1445 = vmatprep.subr.mxu0 0.0
        %1446 = vmatpush1.xpose.msra.mxu0 0.0
        %1447 = vmatprep.subr.mxu0 0.0
        %1448 = vmatpush1.xpose.msra.mxu0 0.0
        %1449 = vmatprep.subr.mxu0 0.0
        %1450 = vmatpush1.xpose.msra.mxu0 0.0
        %1451 = vmatprep.subr.mxu0 0.0
        %1452 = vmatpush1.xpose.msra.mxu0 %v1419
        %1453 = vmatprep.subr.mxu0 0.0
        %1454 = vmatpush2.xpose.msra.mxu0 0.0
        %1455 = vmatprep.subr.mxu0 0.0
        %1456 = vmatpush2.xpose.msra.mxu0 0.0
        %1457 = vmatprep.subr.mxu0 0.0
        %1458 = vmatpush2.xpose.msra.mxu0 0.0
        %1459 = vmatprep.subr.mxu0 0.0
        %1460 = vmatpush2.xpose.msra.mxu0 0.0
        %1461 = vmatprep.subr.mxu0 0.0
        %1462 = vmatpush2.xpose.msra.mxu0 0.0
        %1463 = vmatprep.subr.mxu0 0.0
        %1464 = vmatpush2.xpose.msra.mxu0 0.0
        %1465 = vmatprep.subr.mxu0 0.0
        %1466 = vmatpush2.xpose.msra.mxu0 0.0
        %1467 = vmatprep.subr.mxu0 0.0
        %1468 = vmatpush2.xpose.msra.mxu0 0.0
        %1469 = vmatprep.subr.mxu0 0.0
        %1470 = vmatpush2.xpose.msra.mxu0 0.0
        %1471 = vmatprep.subr.mxu0 0.0
        %1472 = vmatpush2.xpose.msra.mxu0 0.0
        %1473 = vmatprep.subr.mxu0 0.0
        %1474 = vmatpush2.xpose.msra.mxu0 0.0
        %1475 = vmatprep.subr.mxu0 0.0
        %1476 = vmatpush2.xpose.msra.mxu0 0.0
        %1477 = vmatprep.subr.mxu0 0.0
        %1478 = vmatpush2.xpose.msra.mxu0 0.0
        %1479 = vmatprep.subr.mxu0 0.0
        %1480 = vmatpush2.xpose.msra.mxu0 0.0
        %1481 = vmatprep.subr.mxu0 0.0
        %1482 = vmatpush2.xpose.msra.mxu0 0.0
        %1483 = vmatprep.subr.mxu0 0.0
        %1484 = vmatpush2.xpose.msra.mxu0 0.0
        %1485 = vmatprep.mubr.f32.mxu0 0.0
        %1486 = vmatmul.mubr.f32.gmra.mxu0 %v1417
        %v1487 = vpop.f32.mrf.mxu0
        %v1488 = vadd.f32 0.0, %v1487
        %v1489 = vpop.f32.mrf.mxu0
        %1490 = vdwg.mxu0
        %v1491 = vmul.f32 %v1488, 0.35355338
        %v1492 = vsel %vm692, %v1491, -inf
        %1493 = vmax.xlane.f32.xlu0 %v1492
        %v1494 = vpop.xlane.xlu0 %1493
        %v1495 = vsub.f32 %v1491, %v1494
        %v1496 = vmul.f32 %v1495, 1.442695
        %v1497 = vpow.pop %v1496
        %v1498 = vsel %vm692, %v1497, 0.0
        %1499 = vadd.xlane.f32.xlu0 %v1498
        %v1500 = vpop.xlane.xlu0 %1499
        %v1501 = vrcp.pop %v1500
        %v1502 = vmul.f32 %v1497, %v1501
        %v1503 = vadd.f32 %v1261, %v1502
        %1504 = vrot.lane.b32.xlu0 %v689, 104
        %v1505 = vpop.permute.xlu0 %1504
        %v1508 = vsel %vm692, %v1502, 0
        %1510 = vmatprep.subr.mxu0 0.0
        %1511 = vmatpush1.msra.mxu0 0.0
        %1512 = vmatprep.subr.mxu0 0.0
        %1513 = vmatpush1.msra.mxu0 0.0
        %1514 = vmatprep.subr.mxu0 0.0
        %1515 = vmatpush1.msra.mxu0 0.0
        %1516 = vmatprep.subr.mxu0 0.0
        %1517 = vmatpush1.msra.mxu0 0.0
        %1518 = vmatprep.subr.mxu0 0.0
        %1519 = vmatpush1.msra.mxu0 0.0
        %1520 = vmatprep.subr.mxu0 0.0
        %1521 = vmatpush1.msra.mxu0 0.0
        %1522 = vmatprep.subr.mxu0 0.0
        %1523 = vmatpush1.msra.mxu0 0.0
        %1524 = vmatprep.subr.mxu0 0.0
        %1525 = vmatpush1.msra.mxu0 0.0
        %1526 = vmatprep.subr.mxu0 0.0
        %1527 = vmatpush1.msra.mxu0 0.0
        %1528 = vmatprep.subr.mxu0 0.0
        %1529 = vmatpush1.msra.mxu0 0.0
        %1530 = vmatprep.subr.mxu0 0.0
        %1531 = vmatpush1.msra.mxu0 0.0
        %1532 = vmatprep.subr.mxu0 0.0
        %1533 = vmatpush1.msra.mxu0 0.0
        %1534 = vmatprep.subr.mxu0 0.0
        %1535 = vmatpush1.msra.mxu0 0.0
        %1536 = vmatprep.subr.mxu0 0.0
        %1537 = vmatpush1.msra.mxu0 0.0
        %1538 = vmatprep.subr.mxu0 0.0
        %1539 = vmatpush1.msra.mxu0 0.0
        %1540 = vmatprep.subr.mxu0 0.0
        %1541 = vmatpush1.msra.mxu0 %v1505
        %1542 = vmatprep.subr.mxu0 0.0
        %1543 = vmatpush2.msra.mxu0 0.0
        %1544 = vmatprep.subr.mxu0 0.0
        %1545 = vmatpush2.msra.mxu0 0.0
        %1546 = vmatprep.subr.mxu0 0.0
        %1547 = vmatpush2.msra.mxu0 0.0
        %1548 = vmatprep.subr.mxu0 0.0
        %1549 = vmatpush2.msra.mxu0 0.0
        %1550 = vmatprep.subr.mxu0 0.0
        %1551 = vmatpush2.msra.mxu0 0.0
        %1552 = vmatprep.subr.mxu0 0.0
        %1553 = vmatpush2.msra.mxu0 0.0
        %1554 = vmatprep.subr.mxu0 0.0
        %1555 = vmatpush2.msra.mxu0 0.0
        %1556 = vmatprep.subr.mxu0 0.0
        %1557 = vmatpush2.msra.mxu0 0.0
        %1558 = vmatprep.subr.mxu0 0.0
        %1559 = vmatpush2.msra.mxu0 0.0
        %1560 = vmatprep.subr.mxu0 0.0
        %1561 = vmatpush2.msra.mxu0 0.0
        %1562 = vmatprep.subr.mxu0 0.0
        %1563 = vmatpush2.msra.mxu0 0.0
        %1564 = vmatprep.subr.mxu0 0.0
        %1565 = vmatpush2.msra.mxu0 0.0
        %1566 = vmatprep.subr.mxu0 0.0
        %1567 = vmatpush2.msra.mxu0 0.0
        %1568 = vmatprep.subr.mxu0 0.0
        %1569 = vmatpush2.msra.mxu0 0.0
        %1570 = vmatprep.subr.mxu0 0.0
        %1571 = vmatpush2.msra.mxu0 0.0
        %1572 = vmatprep.subr.mxu0 0.0
        %1573 = vmatpush2.msra.mxu0 0.0
        %1574 = vmatprep.mubr.f32.mxu0 0.0
        %1575 = vmatmul.mubr.f32.gmra.mxu0 %v1508
        %v1576 = vpop.f32.mrf.mxu0
        %v1577 = vadd.f32 0.0, %v1576
        %v1578 = vpop.f32.mrf.mxu0
        %1579 = vdwg.mxu0
        %v1580 = vld [vmem:[#allocation10 + $0x18] sm:$0xff]
        %v1582 = vsel %vm692, %v1577, 0
        %1584 = vmatprep.subr.mxu0 0.0
        %1585 = vmatpush1.msra.mxu0 0.0
        %1586 = vmatprep.subr.mxu0 0.0
        %1587 = vmatpush1.msra.mxu0 0.0
        %1588 = vmatprep.subr.mxu0 0.0
        %1589 = vmatpush1.msra.mxu0 0.0
        %1590 = vmatprep.subr.mxu0 0.0
        %1591 = vmatpush1.msra.mxu0 0.0
        %1592 = vmatprep.subr.mxu0 0.0
        %1593 = vmatpush1.msra.mxu0 0.0
        %1594 = vmatprep.subr.mxu0 0.0
        %1595 = vmatpush1.msra.mxu0 0.0
        %1596 = vmatprep.subr.mxu0 0.0
        %1597 = vmatpush1.msra.mxu0 0.0
        %1598 = vmatprep.subr.mxu0 0.0
        %1599 = vmatpush1.msra.mxu0 0.0
        %1600 = vmatprep.subr.mxu0 0.0
        %1601 = vmatpush1.msra.mxu0 0.0
        %1602 = vmatprep.subr.mxu0 0.0
        %1603 = vmatpush1.msra.mxu0 0.0
        %1604 = vmatprep.subr.mxu0 0.0
        %1605 = vmatpush1.msra.mxu0 0.0
        %1606 = vmatprep.subr.mxu0 0.0
        %1607 = vmatpush1.msra.mxu0 0.0
        %1608 = vmatprep.subr.mxu0 0.0
        %1609 = vmatpush1.msra.mxu0 0.0
        %1610 = vmatprep.subr.mxu0 0.0
        %1611 = vmatpush1.msra.mxu0 0.0
        %1612 = vmatprep.subr.mxu0 0.0
        %1613 = vmatpush1.msra.mxu0 0.0
        %1614 = vmatprep.subr.mxu0 0.0
        %1615 = vmatpush1.msra.mxu0 %v1580
        %1616 = vmatprep.subr.mxu0 0.0
        %1617 = vmatpush2.msra.mxu0 0.0
        %1618 = vmatprep.subr.mxu0 0.0
        %1619 = vmatpush2.msra.mxu0 0.0
        %1620 = vmatprep.subr.mxu0 0.0
        %1621 = vmatpush2.msra.mxu0 0.0
        %1622 = vmatprep.subr.mxu0 0.0
        %1623 = vmatpush2.msra.mxu0 0.0
        %1624 = vmatprep.subr.mxu0 0.0
        %1625 = vmatpush2.msra.mxu0 0.0
        %1626 = vmatprep.subr.mxu0 0.0
        %1627 = vmatpush2.msra.mxu0 0.0
        %1628 = vmatprep.subr.mxu0 0.0
        %1629 = vmatpush2.msra.mxu0 0.0
        %1630 = vmatprep.subr.mxu0 0.0
        %1631 = vmatpush2.msra.mxu0 0.0
        %1632 = vmatprep.subr.mxu0 0.0
        %1633 = vmatpush2.msra.mxu0 0.0
        %1634 = vmatprep.subr.mxu0 0.0
        %1635 = vmatpush2.msra.mxu0 0.0
        %1636 = vmatprep.subr.mxu0 0.0
        %1637 = vmatpush2.msra.mxu0 0.0
        %1638 = vmatprep.subr.mxu0 0.0
        %1639 = vmatpush2.msra.mxu0 0.0
        %1640 = vmatprep.subr.mxu0 0.0
        %1641 = vmatpush2.msra.mxu0 0.0
        %1642 = vmatprep.subr.mxu0 0.0
        %1643 = vmatpush2.msra.mxu0 0.0
        %1644 = vmatprep.subr.mxu0 0.0
        %1645 = vmatpush2.msra.mxu0 0.0
        %1646 = vmatprep.subr.mxu0 0.0
        %1647 = vmatpush2.msra.mxu0 0.0
        %1648 = vmatprep.mubr.f32.mxu0 0.0
        %1649 = vmatmul.mubr.f32.gmra.mxu0 %v1582
        %v1650 = vpop.f32.mrf.mxu0
        %v1651 = vadd.f32 0.0, %v1650
        %v1652 = vpop.f32.mrf.mxu0
        %1653 = vdwg.mxu0
        %v1654 = vadd.f32 %v1412, %v1651
        %v1655 = vld [vmem:[%s8] sm:$0x1]
        %v1657 = vlaneseq
        %v1658 = vshrl.u32 %v1657, 7
        %v1659 = vsub.s32 0, %v1658
        %v1660 = vrot.slane %v1655, %v1659
        %v1662 = vadd.f32 %v1654, %v1660
        %1663 = vst.msk [vmem:[%s436] sm:$0xff] %vm456, %v1662
        %v1664 = vmul.f32 %v1503, 0.25
        %1665 = vst.msk [vmem:[%s443] sm:$0xff] %vm692, %v1664
        %s1666 = sand.u32 %s235, 1
        %s1667 = scalar_lea.sflag [#allocation4], %s1666
        %s1668 = sand.u32 %s235, 1
        %s1669 = smul.addr %s1668, 8
        %s1670 = scalar_lea.vmem [#allocation11], %s1669
        %s1671 = sand.u32 %s261, 1
        %s1672 = scalar_lea.sflag [#allocation13], %s1671
        %s1673 = sand.u32 %s261, 1
        %s1674 = smul.addr %s1673, 8
        %s1675 = scalar_lea.vmem [#allocation12], %s1674
        // Predicated region
        $region77: #{tpu_custom_call.1} parent=55 // pred_check
          %p1676 = pneg %p245
        $region78: #{tpu_custom_call.1} parent=55 // pred_check_branch
          %1678 = sbr.rel (%p1676) target = $region80
        $region79: #{tpu_custom_call.1} parent=55 // pred_region
          %s1680 = ssub.s32 128, 128
          %1681 = vsyncadd %s1667, %s1680
          %s1682 = smul.addr %s33, 128
          %s1683 = scalar_lea.hbm %s9, %s1682
          %s1685 = sshll.u32 %s1670, 4
          %s1686 = int_to_ptr.vmem [resolvable:$true] %s1685
          %1688 = dma.vmem_to_hbm [thread:$0]  %s1686, 128, %s1683, %s1667
        $region80: #{tpu_custom_call.1} parent=55 // pred_fallthru
          _
        // Predicated region
        $region81: #{tpu_custom_call.1} parent=55 // pred_check
          %p1689 = pneg %p271
        $region82: #{tpu_custom_call.1} parent=55 // pred_check_branch
          %1691 = sbr.rel (%p1689) target = $region84
        $region83: #{tpu_custom_call.1} parent=55 // pred_region
          %s1693 = ssub.s32 128, 128
          %1694 = vsyncadd %s1672, %s1693
          %s1695 = smul.addr %s33, 128
          %s1696 = scalar_lea.hbm %s10, %s1695
          %s1698 = sshll.u32 %s1675, 4
          %s1699 = int_to_ptr.vmem [resolvable:$true] %s1698
          %1701 = dma.vmem_to_hbm [thread:$0]  %s1699, 128, %s1696, %s1672
        $region84: #{tpu_custom_call.1} parent=55 // pred_fallthru
          _
      $region56: #{tpu_custom_call.1} parent=5 // pred_fallthru
        _
      %p1702 = scmp.le.s32.totalorder 2, %s28
      // Predicated region
      $region85: #{tpu_custom_call.1} parent=5 // pred_check
        %p1703 = pneg %p1702
      $region86: #{tpu_custom_call.1} parent=5 // pred_check_branch
        %1705 = sbr.rel (%p1703) target = $region88
      $region87: #{tpu_custom_call.1} parent=5 // pred_region
        %s1706 = ssub.s32 %s28, 2
        // Predicated region
        $region89: #{tpu_custom_call.1} parent=87 // pred_check
          %p1707 = pneg %p251
        $region90: #{tpu_custom_call.1} parent=87 // pred_check_branch
          %1709 = sbr.rel (%p1707) target = $region92
        $region91: #{tpu_custom_call.1} parent=87 // pred_region
          %s1710 = sand.u32 %s236, 1
          %s1711 = scalar_lea.sflag [#allocation4], %s1710
          %s1712 = sand.u32 %s236, 1
          %s1713 = smul.addr %s1712, 8
          %s1714 = scalar_lea.vmem [#allocation11], %s1713
          %1715 = dma.done %s1711, 128
        $region92: #{tpu_custom_call.1} parent=87 // pred_fallthru
          _
        // Predicated region
        $region93: #{tpu_custom_call.1} parent=87 // pred_check
          %p1716 = pneg %p277
        $region94: #{tpu_custom_call.1} parent=87 // pred_check_branch
          %1718 = sbr.rel (%p1716) target = $region96
        $region95: #{tpu_custom_call.1} parent=87 // pred_region
          %s1719 = sand.u32 %s262, 1
          %s1720 = scalar_lea.sflag [#allocation13], %s1719
          %s1721 = sand.u32 %s262, 1
          %s1722 = smul.addr %s1721, 8
          %s1723 = scalar_lea.vmem [#allocation12], %s1722
          %1724 = dma.done %s1720, 128
        $region96: #{tpu_custom_call.1} parent=87 // pred_fallthru
          _
      $region88: #{tpu_custom_call.1} parent=5 // pred_fallthru
        _
    $region6: #{tpu_custom_call.1} parent=1 // loop_footer
      %s32 = sadd.s32 1, %s28
    $region7: #{tpu_custom_call.1} parent=1 // loop_footer_branch
      %27 = sbr.rel target = $region3
    $region8: #{tpu_custom_call.1} parent=1 // loop_exit
      _
    %1725 = vsyncpa [#allocation3], 1
    %s1726 = scalar_lea.sflag [#allocation3], 1
    %1727 = vsyncpa %s1726, 1
    %1728 = vsyncpa [#allocation6], 1
    %1729 = vsyncpa [#allocation9], 1
    %1730 = vsyncpa [#allocation4], 1
    %s1731 = scalar_lea.sflag [#allocation4], 1
    %1732 = vsyncpa %s1731, 1
    %1733 = vsyncpa [#allocation13], 1
    %s1734 = scalar_lea.sflag [#allocation13], 1
    %1735 = vsyncpa %s1734, 1

</llo_original>
